<compile_context>
chip_gen: v5e
topology: v5e:2x2
jax: 0.10.0
libtpu: 0.0.40
codegen_flags: <defaults>
</compile_context>

<pallas_src>
import functools
import math

import jax
import jax.numpy as jnp
import numpy as np
from jax.experimental import pallas as pl
from jax.experimental.pallas import tpu as pltpu


# Column layout of all packed 8H-wide gate tensors (each chunk is H lanes):
#   [f_f, f_b, i_f, i_b, o_f, o_b, g_f, g_b]
# torch row-block gate order is (i, f, g, o) -> placed at positions (f,i,o,g).
_GATE_ORDER = (1, 0, 3, 2)   # torch gate index for column position p


# ---------------------------------------------------------------------------
# Fused forward+backward LSTM recurrence, fully unrolled over T.
#   xs_ref : (T*B, 8H) direction-arranged input projections (row block s holds
#            fwd gates for time s and bwd gates for time T-1-s).
#   wh     : (2H, 8H) block-diagonal hidden weights (bf16).
#   returns list of T step states, hs[s] = [h_fwd(time s) | h_bwd(time T-1-s)].
# ---------------------------------------------------------------------------
def _bidir_lstm_steps(xs_ref, wh, act_scale, act_off, T, B, H):
    f32 = jnp.float32
    h = jnp.zeros((B, 2 * H), f32)
    c = jnp.zeros((B, 2 * H), f32)
    hs = []
    for s in range(T):
        xg = xs_ref[s * B:(s + 1) * B, :]                    # (B, 8H) one load
        if s == 0:
            gates = xg                                       # h == 0: skip MXU
        else:
            gates = xg + jnp.dot(h.astype(wh.dtype), wh,
                                 preferred_element_type=f32)
        # One masked tanh implements sigmoid (0.5*tanh(0.5x)+0.5) and tanh.
        act = jnp.tanh(gates * act_scale) * act_scale + act_off
        f_g = act[:, 0 * H:2 * H]                            # [f_f | f_b]
        i_g = act[:, 2 * H:4 * H]                            # [i_f | i_b]
        o_g = act[:, 4 * H:6 * H]                            # [o_f | o_b]
        g_g = act[:, 6 * H:8 * H]                            # [g_f | g_b]
        c = f_g * c + i_g * g_g
        h = o_g * jnp.tanh(c)
        hs.append(h)
    return hs


# ---------------------------------------------------------------------------
# Whole forward pass in a single grid-less pallas_call (fits VMEM easily).
# ---------------------------------------------------------------------------
def _history_attention_kernel(x0_ref,                        # (T*B, 2D) bf16
                              wx0_ref, wh0_ref, b0_ref,      # layer 0 packed
                              wx1_ref, wh1_ref, b1_ref,      # layer 1 packed
                              attn_w_ref,                    # (1, 2H) VMEM
                              attn_b_ref,                    # (1, 1)  SMEM
                              out_ref,                       # (B, 4H)
                              xs_ref,                        # (T*B, 8H) scratch
                              x1_ref,                        # (T*B, 4H) scratch
                              *, T, B, H, approx_softmax):
    f32 = jnp.float32
    G = 8 * H

    # Hoisted activation constants: g-gate columns (lanes >= 6H) use plain tanh.
    lane_g = jax.lax.broadcasted_iota(jnp.int32, (B, G), dimension=1)
    is_g = lane_g >= 6 * H
    act_scale = jnp.where(is_g, 1.0, 0.5).astype(f32)
    act_off = jnp.where(is_g, 0.0, 0.5).astype(f32)

    # ---- layer 0: one bf16 projection matmul, already direction-arranged ----
    xs_ref[...] = (jnp.dot(x0_ref[...], wx0_ref[...],
                           preferred_element_type=f32) + b0_ref[...])
    hs0 = _bidir_lstm_steps(xs_ref, wh0_ref[...], act_scale, act_off, T, B, H)

    # ---- layer-1 input slab: row block s = [hs0[s] | hs0[T-1-s]] -----------
    # (wx1's row permutation maps these lanes to the right gate columns, so no
    #  per-step or per-t selects/concats are needed here.)
    for s in range(T):
        x1_ref[s * B:(s + 1) * B, 0:2 * H] = hs0[s]
        x1_ref[s * B:(s + 1) * B, 2 * H:4 * H] = hs0[T - 1 - s]

    # ---- layer 1: hoisted bf16 projection of the (T*B, 4H) slab ------------
    xs_ref[...] = (jnp.dot(x1_ref[...].astype(wx1_ref.dtype), wx1_ref[...],
                           preferred_element_type=f32) + b1_ref[...])
    hs1 = _bidir_lstm_steps(xs_ref, wh1_ref[...], act_scale, act_off, T, B, H)

    # ---- time-ordered layer-1 outputs via lane-mask vsel --------------------
    lane_h = jax.lax.broadcasted_iota(jnp.int32, (B, 2 * H), dimension=1)
    is_fwd_half = lane_h < H
    y1 = [jnp.where(is_fwd_half, hs1[t], hs1[T - 1 - t]) for t in range(T)]
    outs = jnp.stack(y1, axis=0)                             # (T, B, 2H)

    # ---- attention pooling over time (softmax along T) ----------------------
    aw = attn_w_ref[...]                                     # (1, 2H)
    ab = attn_b_ref[0, 0]                                    # scalar from SMEM
    scores = jnp.sum(outs * aw, axis=-1, keepdims=True) + ab         # (T, B, 1)
    m = jnp.max(scores, axis=0, keepdims=True)
    e = jnp.exp(scores - m)
    denom = jnp.sum(e, axis=0, keepdims=True)
    if approx_softmax:
        w = e * pl.reciprocal(denom, approx=True)
    else:
        w = e / denom
    attn_out = jnp.sum(outs * w, axis=0)                     # (B, 2H)

    # torch.cat([last_out, attn_out], dim=1) as two aligned partial stores.
    out_ref[:, 0:2 * H] = y1[T - 1]
    out_ref[:, 2 * H:4 * H] = attn_out


# ---------------------------------------------------------------------------
# Wrapper: layout plumbing + pallas_call.
# ---------------------------------------------------------------------------
@functools.partial(jax.jit, static_argnames=("approx_softmax",))
def history_attention_rnn_pallas(seq, packed, *, approx_softmax=True):
    B, T, D = seq.shape
    H = packed["wh0"].shape[0] // 2

    # Row block s of x0 = [seq(time s) | seq(time T-1-s)]  -> (T*B, 2D), bf16.
    seq_t = jnp.transpose(seq, (1, 0, 2))                    # (T, B, D)
    x0 = jnp.concatenate([seq_t, seq_t[::-1]], axis=-1)      # (T, B, 2D)
    x0 = x0.reshape(T * B, 2 * D).astype(jnp.bfloat16)

    kernel = functools.partial(_history_attention_kernel, T=T, B=B, H=H,
                               approx_softmax=approx_softmax)
    vmem = pl.BlockSpec(memory_space=pltpu.MemorySpace.VMEM)
    smem = pl.BlockSpec(memory_space=pltpu.MemorySpace.SMEM)

    return pl.pallas_call(
        kernel,
        out_shape=jax.ShapeDtypeStruct((B, 4 * H), jnp.float32),
        in_specs=[vmem] * 8 + [smem],
        out_specs=vmem,
        scratch_shapes=[pltpu.VMEM((T * B, 8 * H), jnp.float32),
                        pltpu.VMEM((T * B, 4 * H), jnp.float32)],
    )(x0,
      packed["wx0"], packed["wh0"], packed["b0"],
      packed["wx1"], packed["wh1"], packed["b1"],
      packed["attn_w"], packed["attn_b"])


# ---------------------------------------------------------------------------
# Parameter init (torch nn.LSTM / nn.Linear shapes; b = b_ih + b_hh pre-summed)
# ---------------------------------------------------------------------------
def init_params(key, input_size, hidden):
    k = 1.0 / math.sqrt(hidden)
    keys = jax.random.split(key, 18)
    idx = 0
    params = {}
    for layer in range(2):
        din = input_size if layer == 0 else 2 * hidden
        for d in ("f", "b"):
            w_ih = jax.random.uniform(keys[idx], (4 * hidden, din),
                                      jnp.float32, -k, k); idx += 1
            w_hh = jax.random.uniform(keys[idx], (4 * hidden, hidden),
                                      jnp.float32, -k, k); idx += 1
            b_ih = jax.random.uniform(keys[idx], (4 * hidden,),
                                      jnp.float32, -k, k); idx += 1
            b_hh = jax.random.uniform(keys[idx], (4 * hidden,),
                                      jnp.float32, -k, k); idx += 1
            params[f"l{layer}_{d}"] = dict(w_ih=w_ih, w_hh=w_hh, b=b_ih + b_hh)
    ka = 1.0 / math.sqrt(2 * hidden)
    params["attn_w"] = jax.random.uniform(keys[idx], (1, 2 * hidden),
                                          jnp.float32, -ka, ka); idx += 1
    params["attn_b"] = jax.random.uniform(keys[idx], (1,),
                                          jnp.float32, -ka, ka)
    return params


# ---------------------------------------------------------------------------
# Packing into the fused, direction-arranged, gate-major layout.
#   columns (8H): [f_f, f_b, i_f, i_b, o_f, o_b, g_f, g_b], H lanes each.
#   wh : (2H, 8H) block-diag (rows 0:H fwd state, rows H:2H bwd state), bf16.
#   wx0: (2D, 8H) block-diag (rows 0:D = seq(t=s) -> fwd cols,
#                              rows D:2D = seq(t=T-1-s) -> bwd cols), bf16.
#   wx1: (4H, 8H) permuted block-diag matching x1 lanes
#        [h_f(s) | h_b(T-1-s) | h_f(T-1-s) | h_b(s)], bf16.
#   b  : (1, 8H) f32, b_ih + b_hh per direction.
# ---------------------------------------------------------------------------
def pack_params(params, hidden):
    H = hidden

    def pack_layer(pf, pb, layer):
        din = pf["w_ih"].shape[1]
        wx = jnp.zeros((2 * din, 8 * H), jnp.float32)
        wh = jnp.zeros((2 * H, 8 * H), jnp.float32)
        bias = jnp.zeros((1, 8 * H), jnp.float32)
        for p, tg in enumerate(_GATE_ORDER):       # p: column slot, tg: torch gate
            rg = slice(tg * H, (tg + 1) * H)
            cf = slice((2 * p) * H, (2 * p + 1) * H)
            cb = slice((2 * p + 1) * H, (2 * p + 2) * H)
            wh = wh.at[0:H, cf].set(pf["w_hh"][rg, :].T)
            wh = wh.at[H:2 * H, cb].set(pb["w_hh"][rg, :].T)
            bias = bias.at[0, cf].set(pf["b"][rg])
            bias = bias.at[0, cb].set(pb["b"][rg])
            if layer == 0:
                wx = wx.at[0:din, cf].set(pf["w_ih"][rg, :].T)
                wx = wx.at[din:2 * din, cb].set(pb["w_ih"][rg, :].T)
            else:
                # x1 lanes: [h_f(s) | h_b(T-1-s) | h_f(T-1-s) | h_b(s)]
                wx = wx.at[0:H, cf].set(pf["w_ih"][rg, 0:H].T)           # h_f(s)
                wx = wx.at[3 * H:4 * H, cf].set(pf["w_ih"][rg, H:2 * H].T)  # h_b(s)
                wx = wx.at[2 * H:3 * H, cb].set(pb["w_ih"][rg, 0:H].T)   # h_f(T-1-s)
                wx = wx.at[H:2 * H, cb].set(pb["w_ih"][rg, H:2 * H].T)   # h_b(T-1-s)
        return wx.astype(jnp.bfloat16), wh.astype(jnp.bfloat16), bias

    wx0, wh0, b0 = pack_layer(params["l0_f"], params["l0_b"], 0)
    wx1, wh1, b1 = pack_layer(params["l1_f"], params["l1_b"], 1)
    return dict(wx0=wx0, wh0=wh0, b0=b0, wx1=wx1, wh1=wh1, b1=b1,
                attn_w=params["attn_w"].astype(jnp.float32),
                attn_b=params["attn_b"].reshape(1, 1).astype(jnp.float32))


# ---------------------------------------------------------------------------
# Pure-JAX reference (same math as the PyTorch module, eval mode).
# ---------------------------------------------------------------------------
def ref_forward(seq, params):
    B, T, _ = seq.shape
    H = params["l0_f"]["w_hh"].shape[1]

    def run_dir(x, p, reverse):
        w_ih, w_hh, b = p["w_ih"], p["w_hh"], p["b"]
        xs = jnp.transpose(x, (1, 0, 2))          # (T, B, Din)
        if reverse:
            xs = xs[::-1]

        def step(carry, xt):
            h, c = carry
            g = xt @ w_ih.T + h @ w_hh.T + b
            i = jax.nn.sigmoid(g[:, 0:H])
            f = jax.nn.sigmoid(g[:, H:2 * H])
            gg = jnp.tanh(g[:, 2 * H:3 * H])
            o = jax.nn.sigmoid(g[:, 3 * H:4 * H])
            c = f * c + i * gg
            h = o * jnp.tanh(c)
            return (h, c), h

        init = (jnp.zeros((B, H), jnp.float32), jnp.zeros((B, H), jnp.float32))
        _, hs = jax.lax.scan(step, init, xs)
        if reverse:
            hs = hs[::-1]
        return jnp.transpose(hs, (1, 0, 2))       # (B, T, H)

    x = seq
    for layer in range(2):
        hf = run_dir(x, params[f"l{layer}_f"], reverse=False)
        hb = run_dir(x, params[f"l{layer}_b"], reverse=True)
        x = jnp.concatenate([hf, hb], axis=-1)    # (B, T, 2H)

    outputs = x
    scores = (jnp.einsum("btk,k->bt", outputs, params["attn_w"][0])
              + params["attn_b"][0])
    w = jax.nn.softmax(scores, axis=1)[..., None]
    attn_out = jnp.sum(outputs * w, axis=1)
    last_out = outputs[:, -1, :]
    return jnp.concatenate([last_out, attn_out], axis=1)


if __name__ == "__main__":
    INPUT_SIZE, HIDDEN, B, T = 32, 32, 8, 8
    key = jax.random.PRNGKey(0)
    pkey, xkey = jax.random.split(key)
    params = init_params(pkey, INPUT_SIZE, HIDDEN)
    packed = pack_params(params, HIDDEN)
    seq = jax.random.normal(xkey, (B, T, INPUT_SIZE), jnp.float32)

    out = history_attention_rnn_pallas(seq, packed)
    out = jax.block_until_ready(out)

    ref = ref_forward(seq, params)
    assert out.shape == (B, 4 * HIDDEN), out.shape
    np.testing.assert_allclose(np.asarray(out), np.asarray(ref),
                               rtol=2e-2, atol=2e-2)
    print("KERNEL_OK")
</pallas_src>

<mosaic_0001>
module attributes {stable_mosaic.version = 11 : i64} {
  func.func @_history_attention_kernel(%arg0: memref<64x64xbf16, #tpu.memory_space<vmem>>, %arg1: memref<64x256xbf16, #tpu.memory_space<vmem>>, %arg2: memref<64x256xbf16, #tpu.memory_space<vmem>>, %arg3: memref<1x256xf32, #tpu.memory_space<vmem>>, %arg4: memref<128x256xbf16, #tpu.memory_space<vmem>>, %arg5: memref<64x256xbf16, #tpu.memory_space<vmem>>, %arg6: memref<1x256xf32, #tpu.memory_space<vmem>>, %arg7: memref<1x64xf32, #tpu.memory_space<vmem>>, %arg8: memref<1x1xf32, #tpu.memory_space<smem>>, %arg9: memref<8x128xf32, #tpu.memory_space<vmem>>, %arg10: memref<64x256xf32, #tpu.memory_space<vmem>>, %arg11: memref<64x128xf32, #tpu.memory_space<vmem>>) attributes {dimension_semantics = [], scalar_prefetch = 0 : i64, scratch_operands = 2 : i64, tpu.core_type = #tpu.core_type<tc>} {
    %0 = tpu.iota {dimensions = array<i32: 1>} : vector<8x256xi32>
    %c192_i32 = arith.constant 192 : i32
    %1 = vector.broadcast %c192_i32 : i32 to vector<8x256xi32>
    %2 = arith.cmpi sge, %0, %1 : vector<8x256xi32>
    %cst = arith.constant 1.000000e+00 : f32
    %cst_0 = arith.constant 5.000000e-01 : f32
    %3 = vector.broadcast %cst : f32 to vector<8x256xf32>
    %4 = vector.broadcast %cst_0 : f32 to vector<8x256xf32>
    %5 = arith.select %2, %3, %4 : vector<8x256xi1>, vector<8x256xf32>
    %cst_1 = arith.constant 0.000000e+00 : f32
    %cst_2 = arith.constant 5.000000e-01 : f32
    %6 = vector.broadcast %cst_1 : f32 to vector<8x256xf32>
    %7 = vector.broadcast %cst_2 : f32 to vector<8x256xf32>
    %8 = arith.select %2, %6, %7 : vector<8x256xi1>, vector<8x256xf32>
    %c0 = arith.constant 0 : index
    %c0_3 = arith.constant 0 : index
    %9 = vector.load %arg0[%c0, %c0_3] : memref<64x64xbf16, #tpu.memory_space<vmem>>, vector<64x64xbf16>
    %c0_4 = arith.constant 0 : index
    %c0_5 = arith.constant 0 : index
    %10 = vector.load %arg1[%c0_4, %c0_5] : memref<64x256xbf16, #tpu.memory_space<vmem>>, vector<64x256xbf16>
    %cst_6 = arith.constant dense<0.000000e+00> : vector<64x256xf32>
    %11 = tpu.matmul %9, %10, %cst_6 {dimension_numbers = #tpu.dot_dimension_numbers<[1], [0], [0], [1], [0, 0, 1, 1], [], []>} : vector<64x64xbf16>, vector<64x256xbf16>, vector<64x256xf32> -> vector<64x256xf32>
    %c0_7 = arith.constant 0 : index
    %c0_8 = arith.constant 0 : index
    %12 = vector.load %arg3[%c0_7, %c0_8] : memref<1x256xf32, #tpu.memory_space<vmem>>, vector<1x256xf32>
    %13 = vector.broadcast %12 : vector<1x256xf32> to vector<64x256xf32>
    %14 = arith.addf %11, %13 : vector<64x256xf32>
    %c0_9 = arith.constant 0 : index
    %c0_10 = arith.constant 0 : index
    %15 = vector.load %arg10[%c0_9, %c0_10] : memref<64x256xf32, #tpu.memory_space<vmem>>, vector<64x256xf32>
    tpu.vector_store %arg10[%c0_9, %c0_10], %14 {strides = array<i32>} : memref<64x256xf32, #tpu.memory_space<vmem>>, vector<64x256xf32>,
    %c0_11 = arith.constant 0 : index
    %c0_12 = arith.constant 0 : index
    %16 = vector.load %arg2[%c0_11, %c0_12] : memref<64x256xbf16, #tpu.memory_space<vmem>>, vector<64x256xbf16>
    %cst_13 = arith.constant 0.000000e+00 : f32
    %17 = vector.broadcast %cst_13 : f32 to vector<8x64xf32>
    %c0_14 = arith.constant 0 : index
    %c0_15 = arith.constant 0 : index
    %18 = vector.load %arg10[%c0_14, %c0_15] : memref<64x256xf32, #tpu.memory_space<vmem>>, vector<8x256xf32>
    %19 = arith.mulf %18, %5 : vector<8x256xf32>
    %20 = math.tanh %19 : vector<8x256xf32>
    %21 = arith.mulf %20, %5 : vector<8x256xf32>
    %22 = arith.addf %21, %8 : vector<8x256xf32>
    %23 = vector.extract_strided_slice %22 {offsets = [0, 0], sizes = [8, 64], strides = [1, 1]} : vector<8x256xf32> to vector<8x64xf32>
    %24 = vector.extract_strided_slice %22 {offsets = [0, 64], sizes = [8, 64], strides = [1, 1]} : vector<8x256xf32> to vector<8x64xf32>
    %25 = vector.extract_strided_slice %22 {offsets = [0, 128], sizes = [8, 64], strides = [1, 1]} : vector<8x256xf32> to vector<8x64xf32>
    %26 = vector.extract_strided_slice %22 {offsets = [0, 192], sizes = [8, 64], strides = [1, 1]} : vector<8x256xf32> to vector<8x64xf32>
    %27 = arith.mulf %23, %17 : vector<8x64xf32>
    %28 = arith.mulf %24, %26 : vector<8x64xf32>
    %29 = arith.addf %27, %28 : vector<8x64xf32>
    %30 = math.tanh %29 : vector<8x64xf32>
    %31 = arith.mulf %25, %30 : vector<8x64xf32>
    %c8 = arith.constant 8 : index
    %c0_16 = arith.constant 0 : index
    %32 = vector.load %arg10[%c8, %c0_16] : memref<64x256xf32, #tpu.memory_space<vmem>>, vector<8x256xf32>
    %33 = arith.truncf %31 : vector<8x64xf32> to vector<8x64xbf16>
    %cst_17 = arith.constant dense<0.000000e+00> : vector<8x256xf32>
    %34 = tpu.matmul %33, %16, %cst_17 {dimension_numbers = #tpu.dot_dimension_numbers<[1], [0], [0], [1], [0, 0, 1, 1], [], []>} : vector<8x64xbf16>, vector<64x256xbf16>, vector<8x256xf32> -> vector<8x256xf32>
    %35 = arith.addf %32, %34 : vector<8x256xf32>
    %36 = arith.mulf %35, %5 : vector<8x256xf32>
    %37 = math.tanh %36 : vector<8x256xf32>
    %38 = arith.mulf %37, %5 : vector<8x256xf32>
    %39 = arith.addf %38, %8 : vector<8x256xf32>
    %40 = vector.extract_strided_slice %39 {offsets = [0, 0], sizes = [8, 64], strides = [1, 1]} : vector<8x256xf32> to vector<8x64xf32>
    %41 = vector.extract_strided_slice %39 {offsets = [0, 64], sizes = [8, 64], strides = [1, 1]} : vector<8x256xf32> to vector<8x64xf32>
    %42 = vector.extract_strided_slice %39 {offsets = [0, 128], sizes = [8, 64], strides = [1, 1]} : vector<8x256xf32> to vector<8x64xf32>
    %43 = vector.extract_strided_slice %39 {offsets = [0, 192], sizes = [8, 64], strides = [1, 1]} : vector<8x256xf32> to vector<8x64xf32>
    %44 = arith.mulf %40, %29 : vector<8x64xf32>
    %45 = arith.mulf %41, %43 : vector<8x64xf32>
    %46 = arith.addf %44, %45 : vector<8x64xf32>
    %47 = math.tanh %46 : vector<8x64xf32>
    %48 = arith.mulf %42, %47 : vector<8x64xf32>
    %c16 = arith.constant 16 : index
    %c0_18 = arith.constant 0 : index
    %49 = vector.load %arg10[%c16, %c0_18] : memref<64x256xf32, #tpu.memory_space<vmem>>, vector<8x256xf32>
    %50 = arith.truncf %48 : vector<8x64xf32> to vector<8x64xbf16>
    %cst_19 = arith.constant dense<0.000000e+00> : vector<8x256xf32>
    %51 = tpu.matmul %50, %16, %cst_19 {dimension_numbers = #tpu.dot_dimension_numbers<[1], [0], [0], [1], [0, 0, 1, 1], [], []>} : vector<8x64xbf16>, vector<64x256xbf16>, vector<8x256xf32> -> vector<8x256xf32>
    %52 = arith.addf %49, %51 : vector<8x256xf32>
    %53 = arith.mulf %52, %5 : vector<8x256xf32>
    %54 = math.tanh %53 : vector<8x256xf32>
    %55 = arith.mulf %54, %5 : vector<8x256xf32>
    %56 = arith.addf %55, %8 : vector<8x256xf32>
    %57 = vector.extract_strided_slice %56 {offsets = [0, 0], sizes = [8, 64], strides = [1, 1]} : vector<8x256xf32> to vector<8x64xf32>
    %58 = vector.extract_strided_slice %56 {offsets = [0, 64], sizes = [8, 64], strides = [1, 1]} : vector<8x256xf32> to vector<8x64xf32>
    %59 = vector.extract_strided_slice %56 {offsets = [0, 128], sizes = [8, 64], strides = [1, 1]} : vector<8x256xf32> to vector<8x64xf32>
    %60 = vector.extract_strided_slice %56 {offsets = [0, 192], sizes = [8, 64], strides = [1, 1]} : vector<8x256xf32> to vector<8x64xf32>
    %61 = arith.mulf %57, %46 : vector<8x64xf32>
    %62 = arith.mulf %58, %60 : vector<8x64xf32>
    %63 = arith.addf %61, %62 : vector<8x64xf32>
    %64 = math.tanh %63 : vector<8x64xf32>
    %65 = arith.mulf %59, %64 : vector<8x64xf32>
    %c24 = arith.constant 24 : index
    %c0_20 = arith.constant 0 : index
    %66 = vector.load %arg10[%c24, %c0_20] : memref<64x256xf32, #tpu.memory_space<vmem>>, vector<8x256xf32>
    %67 = arith.truncf %65 : vector<8x64xf32> to vector<8x64xbf16>
    %cst_21 = arith.constant dense<0.000000e+00> : vector<8x256xf32>
    %68 = tpu.matmul %67, %16, %cst_21 {dimension_numbers = #tpu.dot_dimension_numbers<[1], [0], [0], [1], [0, 0, 1, 1], [], []>} : vector<8x64xbf16>, vector<64x256xbf16>, vector<8x256xf32> -> vector<8x256xf32>
    %69 = arith.addf %66, %68 : vector<8x256xf32>
    %70 = arith.mulf %69, %5 : vector<8x256xf32>
    %71 = math.tanh %70 : vector<8x256xf32>
    %72 = arith.mulf %71, %5 : vector<8x256xf32>
    %73 = arith.addf %72, %8 : vector<8x256xf32>
    %74 = vector.extract_strided_slice %73 {offsets = [0, 0], sizes = [8, 64], strides = [1, 1]} : vector<8x256xf32> to vector<8x64xf32>
    %75 = vector.extract_strided_slice %73 {offsets = [0, 64], sizes = [8, 64], strides = [1, 1]} : vector<8x256xf32> to vector<8x64xf32>
    %76 = vector.extract_strided_slice %73 {offsets = [0, 128], sizes = [8, 64], strides = [1, 1]} : vector<8x256xf32> to vector<8x64xf32>
    %77 = vector.extract_strided_slice %73 {offsets = [0, 192], sizes = [8, 64], strides = [1, 1]} : vector<8x256xf32> to vector<8x64xf32>
    %78 = arith.mulf %74, %63 : vector<8x64xf32>
    %79 = arith.mulf %75, %77 : vector<8x64xf32>
    %80 = arith.addf %78, %79 : vector<8x64xf32>
    %81 = math.tanh %80 : vector<8x64xf32>
    %82 = arith.mulf %76, %81 : vector<8x64xf32>
    %c32 = arith.constant 32 : index
    %c0_22 = arith.constant 0 : index
    %83 = vector.load %arg10[%c32, %c0_22] : memref<64x256xf32, #tpu.memory_space<vmem>>, vector<8x256xf32>
    %84 = arith.truncf %82 : vector<8x64xf32> to vector<8x64xbf16>
    %cst_23 = arith.constant dense<0.000000e+00> : vector<8x256xf32>
    %85 = tpu.matmul %84, %16, %cst_23 {dimension_numbers = #tpu.dot_dimension_numbers<[1], [0], [0], [1], [0, 0, 1, 1], [], []>} : vector<8x64xbf16>, vector<64x256xbf16>, vector<8x256xf32> -> vector<8x256xf32>
    %86 = arith.addf %83, %85 : vector<8x256xf32>
    %87 = arith.mulf %86, %5 : vector<8x256xf32>
    %88 = math.tanh %87 : vector<8x256xf32>
    %89 = arith.mulf %88, %5 : vector<8x256xf32>
    %90 = arith.addf %89, %8 : vector<8x256xf32>
    %91 = vector.extract_strided_slice %90 {offsets = [0, 0], sizes = [8, 64], strides = [1, 1]} : vector<8x256xf32> to vector<8x64xf32>
    %92 = vector.extract_strided_slice %90 {offsets = [0, 64], sizes = [8, 64], strides = [1, 1]} : vector<8x256xf32> to vector<8x64xf32>
    %93 = vector.extract_strided_slice %90 {offsets = [0, 128], sizes = [8, 64], strides = [1, 1]} : vector<8x256xf32> to vector<8x64xf32>
    %94 = vector.extract_strided_slice %90 {offsets = [0, 192], sizes = [8, 64], strides = [1, 1]} : vector<8x256xf32> to vector<8x64xf32>
    %95 = arith.mulf %91, %80 : vector<8x64xf32>
    %96 = arith.mulf %92, %94 : vector<8x64xf32>
    %97 = arith.addf %95, %96 : vector<8x64xf32>
    %98 = math.tanh %97 : vector<8x64xf32>
    %99 = arith.mulf %93, %98 : vector<8x64xf32>
    %c40 = arith.constant 40 : index
    %c0_24 = arith.constant 0 : index
    %100 = vector.load %arg10[%c40, %c0_24] : memref<64x256xf32, #tpu.memory_space<vmem>>, vector<8x256xf32>
    %101 = arith.truncf %99 : vector<8x64xf32> to vector<8x64xbf16>
    %cst_25 = arith.constant dense<0.000000e+00> : vector<8x256xf32>
    %102 = tpu.matmul %101, %16, %cst_25 {dimension_numbers = #tpu.dot_dimension_numbers<[1], [0], [0], [1], [0, 0, 1, 1], [], []>} : vector<8x64xbf16>, vector<64x256xbf16>, vector<8x256xf32> -> vector<8x256xf32>
    %103 = arith.addf %100, %102 : vector<8x256xf32>
    %104 = arith.mulf %103, %5 : vector<8x256xf32>
    %105 = math.tanh %104 : vector<8x256xf32>
    %106 = arith.mulf %105, %5 : vector<8x256xf32>
    %107 = arith.addf %106, %8 : vector<8x256xf32>
    %108 = vector.extract_strided_slice %107 {offsets = [0, 0], sizes = [8, 64], strides = [1, 1]} : vector<8x256xf32> to vector<8x64xf32>
    %109 = vector.extract_strided_slice %107 {offsets = [0, 64], sizes = [8, 64], strides = [1, 1]} : vector<8x256xf32> to vector<8x64xf32>
    %110 = vector.extract_strided_slice %107 {offsets = [0, 128], sizes = [8, 64], strides = [1, 1]} : vector<8x256xf32> to vector<8x64xf32>
    %111 = vector.extract_strided_slice %107 {offsets = [0, 192], sizes = [8, 64], strides = [1, 1]} : vector<8x256xf32> to vector<8x64xf32>
    %112 = arith.mulf %108, %97 : vector<8x64xf32>
    %113 = arith.mulf %109, %111 : vector<8x64xf32>
    %114 = arith.addf %112, %113 : vector<8x64xf32>
    %115 = math.tanh %114 : vector<8x64xf32>
    %116 = arith.mulf %110, %115 : vector<8x64xf32>
    %c48 = arith.constant 48 : index
    %c0_26 = arith.constant 0 : index
    %117 = vector.load %arg10[%c48, %c0_26] : memref<64x256xf32, #tpu.memory_space<vmem>>, vector<8x256xf32>
    %118 = arith.truncf %116 : vector<8x64xf32> to vector<8x64xbf16>
    %cst_27 = arith.constant dense<0.000000e+00> : vector<8x256xf32>
    %119 = tpu.matmul %118, %16, %cst_27 {dimension_numbers = #tpu.dot_dimension_numbers<[1], [0], [0], [1], [0, 0, 1, 1], [], []>} : vector<8x64xbf16>, vector<64x256xbf16>, vector<8x256xf32> -> vector<8x256xf32>
    %120 = arith.addf %117, %119 : vector<8x256xf32>
    %121 = arith.mulf %120, %5 : vector<8x256xf32>
    %122 = math.tanh %121 : vector<8x256xf32>
    %123 = arith.mulf %122, %5 : vector<8x256xf32>
    %124 = arith.addf %123, %8 : vector<8x256xf32>
    %125 = vector.extract_strided_slice %124 {offsets = [0, 0], sizes = [8, 64], strides = [1, 1]} : vector<8x256xf32> to vector<8x64xf32>
    %126 = vector.extract_strided_slice %124 {offsets = [0, 64], sizes = [8, 64], strides = [1, 1]} : vector<8x256xf32> to vector<8x64xf32>
    %127 = vector.extract_strided_slice %124 {offsets = [0, 128], sizes = [8, 64], strides = [1, 1]} : vector<8x256xf32> to vector<8x64xf32>
    %128 = vector.extract_strided_slice %124 {offsets = [0, 192], sizes = [8, 64], strides = [1, 1]} : vector<8x256xf32> to vector<8x64xf32>
    %129 = arith.mulf %125, %114 : vector<8x64xf32>
    %130 = arith.mulf %126, %128 : vector<8x64xf32>
    %131 = arith.addf %129, %130 : vector<8x64xf32>
    %132 = math.tanh %131 : vector<8x64xf32>
    %133 = arith.mulf %127, %132 : vector<8x64xf32>
    %c56 = arith.constant 56 : index
    %c0_28 = arith.constant 0 : index
    %134 = vector.load %arg10[%c56, %c0_28] : memref<64x256xf32, #tpu.memory_space<vmem>>, vector<8x256xf32>
    %135 = arith.truncf %133 : vector<8x64xf32> to vector<8x64xbf16>
    %cst_29 = arith.constant dense<0.000000e+00> : vector<8x256xf32>
    %136 = tpu.matmul %135, %16, %cst_29 {dimension_numbers = #tpu.dot_dimension_numbers<[1], [0], [0], [1], [0, 0, 1, 1], [], []>} : vector<8x64xbf16>, vector<64x256xbf16>, vector<8x256xf32> -> vector<8x256xf32>
    %137 = arith.addf %134, %136 : vector<8x256xf32>
    %138 = arith.mulf %137, %5 : vector<8x256xf32>
    %139 = math.tanh %138 : vector<8x256xf32>
    %140 = arith.mulf %139, %5 : vector<8x256xf32>
    %141 = arith.addf %140, %8 : vector<8x256xf32>
    %142 = vector.extract_strided_slice %141 {offsets = [0, 0], sizes = [8, 64], strides = [1, 1]} : vector<8x256xf32> to vector<8x64xf32>
    %143 = vector.extract_strided_slice %141 {offsets = [0, 64], sizes = [8, 64], strides = [1, 1]} : vector<8x256xf32> to vector<8x64xf32>
    %144 = vector.extract_strided_slice %141 {offsets = [0, 128], sizes = [8, 64], strides = [1, 1]} : vector<8x256xf32> to vector<8x64xf32>
    %145 = vector.extract_strided_slice %141 {offsets = [0, 192], sizes = [8, 64], strides = [1, 1]} : vector<8x256xf32> to vector<8x64xf32>
    %146 = arith.mulf %142, %131 : vector<8x64xf32>
    %147 = arith.mulf %143, %145 : vector<8x64xf32>
    %148 = arith.addf %146, %147 : vector<8x64xf32>
    %149 = math.tanh %148 : vector<8x64xf32>
    %150 = arith.mulf %144, %149 : vector<8x64xf32>
    %c0_30 = arith.constant 0 : index
    %c0_31 = arith.constant 0 : index
    %151 = vector.load %arg11[%c0_30, %c0_31] : memref<64x128xf32, #tpu.memory_space<vmem>>, vector<8x64xf32>
    tpu.vector_store %arg11[%c0_30, %c0_31], %31 {strides = array<i32>} : memref<64x128xf32, #tpu.memory_space<vmem>>, vector<8x64xf32>,
    %c0_32 = arith.constant 0 : index
    %c64 = arith.constant 64 : index
    %152 = vector.load %arg11[%c0_32, %c64] : memref<64x128xf32, #tpu.memory_space<vmem>>, vector<8x64xf32>
    tpu.vector_store %arg11[%c0_32, %c64], %150 {strides = array<i32>} : memref<64x128xf32, #tpu.memory_space<vmem>>, vector<8x64xf32>,
    %c8_33 = arith.constant 8 : index
    %c0_34 = arith.constant 0 : index
    %153 = vector.load %arg11[%c8_33, %c0_34] : memref<64x128xf32, #tpu.memory_space<vmem>>, vector<8x64xf32>
    tpu.vector_store %arg11[%c8_33, %c0_34], %48 {strides = array<i32>} : memref<64x128xf32, #tpu.memory_space<vmem>>, vector<8x64xf32>,
    %c8_35 = arith.constant 8 : index
    %c64_36 = arith.constant 64 : index
    %154 = vector.load %arg11[%c8_35, %c64_36] : memref<64x128xf32, #tpu.memory_space<vmem>>, vector<8x64xf32>
    tpu.vector_store %arg11[%c8_35, %c64_36], %133 {strides = array<i32>} : memref<64x128xf32, #tpu.memory_space<vmem>>, vector<8x64xf32>,
    %c16_37 = arith.constant 16 : index
    %c0_38 = arith.constant 0 : index
    %155 = vector.load %arg11[%c16_37, %c0_38] : memref<64x128xf32, #tpu.memory_space<vmem>>, vector<8x64xf32>
    tpu.vector_store %arg11[%c16_37, %c0_38], %65 {strides = array<i32>} : memref<64x128xf32, #tpu.memory_space<vmem>>, vector<8x64xf32>,
    %c16_39 = arith.constant 16 : index
    %c64_40 = arith.constant 64 : index
    %156 = vector.load %arg11[%c16_39, %c64_40] : memref<64x128xf32, #tpu.memory_space<vmem>>, vector<8x64xf32>
    tpu.vector_store %arg11[%c16_39, %c64_40], %116 {strides = array<i32>} : memref<64x128xf32, #tpu.memory_space<vmem>>, vector<8x64xf32>,
    %c24_41 = arith.constant 24 : index
    %c0_42 = arith.constant 0 : index
    %157 = vector.load %arg11[%c24_41, %c0_42] : memref<64x128xf32, #tpu.memory_space<vmem>>, vector<8x64xf32>
    tpu.vector_store %arg11[%c24_41, %c0_42], %82 {strides = array<i32>} : memref<64x128xf32, #tpu.memory_space<vmem>>, vector<8x64xf32>,
    %c24_43 = arith.constant 24 : index
    %c64_44 = arith.constant 64 : index
    %158 = vector.load %arg11[%c24_43, %c64_44] : memref<64x128xf32, #tpu.memory_space<vmem>>, vector<8x64xf32>
    tpu.vector_store %arg11[%c24_43, %c64_44], %99 {strides = array<i32>} : memref<64x128xf32, #tpu.memory_space<vmem>>, vector<8x64xf32>,
    %c32_45 = arith.constant 32 : index
    %c0_46 = arith.constant 0 : index
    %159 = vector.load %arg11[%c32_45, %c0_46] : memref<64x128xf32, #tpu.memory_space<vmem>>, vector<8x64xf32>
    tpu.vector_store %arg11[%c32_45, %c0_46], %99 {strides = array<i32>} : memref<64x128xf32, #tpu.memory_space<vmem>>, vector<8x64xf32>,
    %c32_47 = arith.constant 32 : index
    %c64_48 = arith.constant 64 : index
    %160 = vector.load %arg11[%c32_47, %c64_48] : memref<64x128xf32, #tpu.memory_space<vmem>>, vector<8x64xf32>
    tpu.vector_store %arg11[%c32_47, %c64_48], %82 {strides = array<i32>} : memref<64x128xf32, #tpu.memory_space<vmem>>, vector<8x64xf32>,
    %c40_49 = arith.constant 40 : index
    %c0_50 = arith.constant 0 : index
    %161 = vector.load %arg11[%c40_49, %c0_50] : memref<64x128xf32, #tpu.memory_space<vmem>>, vector<8x64xf32>
    tpu.vector_store %arg11[%c40_49, %c0_50], %116 {strides = array<i32>} : memref<64x128xf32, #tpu.memory_space<vmem>>, vector<8x64xf32>,
    %c40_51 = arith.constant 40 : index
    %c64_52 = arith.constant 64 : index
    %162 = vector.load %arg11[%c40_51, %c64_52] : memref<64x128xf32, #tpu.memory_space<vmem>>, vector<8x64xf32>
    tpu.vector_store %arg11[%c40_51, %c64_52], %65 {strides = array<i32>} : memref<64x128xf32, #tpu.memory_space<vmem>>, vector<8x64xf32>,
    %c48_53 = arith.constant 48 : index
    %c0_54 = arith.constant 0 : index
    %163 = vector.load %arg11[%c48_53, %c0_54] : memref<64x128xf32, #tpu.memory_space<vmem>>, vector<8x64xf32>
    tpu.vector_store %arg11[%c48_53, %c0_54], %133 {strides = array<i32>} : memref<64x128xf32, #tpu.memory_space<vmem>>, vector<8x64xf32>,
    %c48_55 = arith.constant 48 : index
    %c64_56 = arith.constant 64 : index
    %164 = vector.load %arg11[%c48_55, %c64_56] : memref<64x128xf32, #tpu.memory_space<vmem>>, vector<8x64xf32>
    tpu.vector_store %arg11[%c48_55, %c64_56], %48 {strides = array<i32>} : memref<64x128xf32, #tpu.memory_space<vmem>>, vector<8x64xf32>,
    %c56_57 = arith.constant 56 : index
    %c0_58 = arith.constant 0 : index
    %165 = vector.load %arg11[%c56_57, %c0_58] : memref<64x128xf32, #tpu.memory_space<vmem>>, vector<8x64xf32>
    tpu.vector_store %arg11[%c56_57, %c0_58], %150 {strides = array<i32>} : memref<64x128xf32, #tpu.memory_space<vmem>>, vector<8x64xf32>,
    %c56_59 = arith.constant 56 : index
    %c64_60 = arith.constant 64 : index
    %166 = vector.load %arg11[%c56_59, %c64_60] : memref<64x128xf32, #tpu.memory_space<vmem>>, vector<8x64xf32>
    tpu.vector_store %arg11[%c56_59, %c64_60], %31 {strides = array<i32>} : memref<64x128xf32, #tpu.memory_space<vmem>>, vector<8x64xf32>,
    %c0_61 = arith.constant 0 : index
    %c0_62 = arith.constant 0 : index
    %167 = vector.load %arg11[%c0_61, %c0_62] : memref<64x128xf32, #tpu.memory_space<vmem>>, vector<64x128xf32>
    %168 = arith.truncf %167 : vector<64x128xf32> to vector<64x128xbf16>
    %c0_63 = arith.constant 0 : index
    %c0_64 = arith.constant 0 : index
    %169 = vector.load %arg4[%c0_63, %c0_64] : memref<128x256xbf16, #tpu.memory_space<vmem>>, vector<128x256xbf16>
    %cst_65 = arith.constant dense<0.000000e+00> : vector<64x256xf32>
    %170 = tpu.matmul %168, %169, %cst_65 {dimension_numbers = #tpu.dot_dimension_numbers<[1], [0], [0], [1], [0, 0, 1, 1], [], []>} : vector<64x128xbf16>, vector<128x256xbf16>, vector<64x256xf32> -> vector<64x256xf32>
    %c0_66 = arith.constant 0 : index
    %c0_67 = arith.constant 0 : index
    %171 = vector.load %arg6[%c0_66, %c0_67] : memref<1x256xf32, #tpu.memory_space<vmem>>, vector<1x256xf32>
    %172 = vector.broadcast %171 : vector<1x256xf32> to vector<64x256xf32>
    %173 = arith.addf %170, %172 : vector<64x256xf32>
    %c0_68 = arith.constant 0 : index
    %c0_69 = arith.constant 0 : index
    %174 = vector.load %arg10[%c0_68, %c0_69] : memref<64x256xf32, #tpu.memory_space<vmem>>, vector<64x256xf32>
    tpu.vector_store %arg10[%c0_68, %c0_69], %173 {strides = array<i32>} : memref<64x256xf32, #tpu.memory_space<vmem>>, vector<64x256xf32>,
    %c0_70 = arith.constant 0 : index
    %c0_71 = arith.constant 0 : index
    %175 = vector.load %arg5[%c0_70, %c0_71] : memref<64x256xbf16, #tpu.memory_space<vmem>>, vector<64x256xbf16>
    %cst_72 = arith.constant 0.000000e+00 : f32
    %176 = vector.broadcast %cst_72 : f32 to vector<8x64xf32>
    %c0_73 = arith.constant 0 : index
    %c0_74 = arith.constant 0 : index
    %177 = vector.load %arg10[%c0_73, %c0_74] : memref<64x256xf32, #tpu.memory_space<vmem>>, vector<8x256xf32>
    %178 = arith.mulf %177, %5 : vector<8x256xf32>
    %179 = math.tanh %178 : vector<8x256xf32>
    %180 = arith.mulf %179, %5 : vector<8x256xf32>
    %181 = arith.addf %180, %8 : vector<8x256xf32>
    %182 = vector.extract_strided_slice %181 {offsets = [0, 0], sizes = [8, 64], strides = [1, 1]} : vector<8x256xf32> to vector<8x64xf32>
    %183 = vector.extract_strided_slice %181 {offsets = [0, 64], sizes = [8, 64], strides = [1, 1]} : vector<8x256xf32> to vector<8x64xf32>
    %184 = vector.extract_strided_slice %181 {offsets = [0, 128], sizes = [8, 64], strides = [1, 1]} : vector<8x256xf32> to vector<8x64xf32>
    %185 = vector.extract_strided_slice %181 {offsets = [0, 192], sizes = [8, 64], strides = [1, 1]} : vector<8x256xf32> to vector<8x64xf32>
    %186 = arith.mulf %182, %176 : vector<8x64xf32>
    %187 = arith.mulf %183, %185 : vector<8x64xf32>
    %188 = arith.addf %186, %187 : vector<8x64xf32>
    %189 = math.tanh %188 : vector<8x64xf32>
    %190 = arith.mulf %184, %189 : vector<8x64xf32>
    %c8_75 = arith.constant 8 : index
    %c0_76 = arith.constant 0 : index
    %191 = vector.load %arg10[%c8_75, %c0_76] : memref<64x256xf32, #tpu.memory_space<vmem>>, vector<8x256xf32>
    %192 = arith.truncf %190 : vector<8x64xf32> to vector<8x64xbf16>
    %cst_77 = arith.constant dense<0.000000e+00> : vector<8x256xf32>
    %193 = tpu.matmul %192, %175, %cst_77 {dimension_numbers = #tpu.dot_dimension_numbers<[1], [0], [0], [1], [0, 0, 1, 1], [], []>} : vector<8x64xbf16>, vector<64x256xbf16>, vector<8x256xf32> -> vector<8x256xf32>
    %194 = arith.addf %191, %193 : vector<8x256xf32>
    %195 = arith.mulf %194, %5 : vector<8x256xf32>
    %196 = math.tanh %195 : vector<8x256xf32>
    %197 = arith.mulf %196, %5 : vector<8x256xf32>
    %198 = arith.addf %197, %8 : vector<8x256xf32>
    %199 = vector.extract_strided_slice %198 {offsets = [0, 0], sizes = [8, 64], strides = [1, 1]} : vector<8x256xf32> to vector<8x64xf32>
    %200 = vector.extract_strided_slice %198 {offsets = [0, 64], sizes = [8, 64], strides = [1, 1]} : vector<8x256xf32> to vector<8x64xf32>
    %201 = vector.extract_strided_slice %198 {offsets = [0, 128], sizes = [8, 64], strides = [1, 1]} : vector<8x256xf32> to vector<8x64xf32>
    %202 = vector.extract_strided_slice %198 {offsets = [0, 192], sizes = [8, 64], strides = [1, 1]} : vector<8x256xf32> to vector<8x64xf32>
    %203 = arith.mulf %199, %188 : vector<8x64xf32>
    %204 = arith.mulf %200, %202 : vector<8x64xf32>
    %205 = arith.addf %203, %204 : vector<8x64xf32>
    %206 = math.tanh %205 : vector<8x64xf32>
    %207 = arith.mulf %201, %206 : vector<8x64xf32>
    %c16_78 = arith.constant 16 : index
    %c0_79 = arith.constant 0 : index
    %208 = vector.load %arg10[%c16_78, %c0_79] : memref<64x256xf32, #tpu.memory_space<vmem>>, vector<8x256xf32>
    %209 = arith.truncf %207 : vector<8x64xf32> to vector<8x64xbf16>
    %cst_80 = arith.constant dense<0.000000e+00> : vector<8x256xf32>
    %210 = tpu.matmul %209, %175, %cst_80 {dimension_numbers = #tpu.dot_dimension_numbers<[1], [0], [0], [1], [0, 0, 1, 1], [], []>} : vector<8x64xbf16>, vector<64x256xbf16>, vector<8x256xf32> -> vector<8x256xf32>
    %211 = arith.addf %208, %210 : vector<8x256xf32>
    %212 = arith.mulf %211, %5 : vector<8x256xf32>
    %213 = math.tanh %212 : vector<8x256xf32>
    %214 = arith.mulf %213, %5 : vector<8x256xf32>
    %215 = arith.addf %214, %8 : vector<8x256xf32>
    %216 = vector.extract_strided_slice %215 {offsets = [0, 0], sizes = [8, 64], strides = [1, 1]} : vector<8x256xf32> to vector<8x64xf32>
    %217 = vector.extract_strided_slice %215 {offsets = [0, 64], sizes = [8, 64], strides = [1, 1]} : vector<8x256xf32> to vector<8x64xf32>
    %218 = vector.extract_strided_slice %215 {offsets = [0, 128], sizes = [8, 64], strides = [1, 1]} : vector<8x256xf32> to vector<8x64xf32>
    %219 = vector.extract_strided_slice %215 {offsets = [0, 192], sizes = [8, 64], strides = [1, 1]} : vector<8x256xf32> to vector<8x64xf32>
    %220 = arith.mulf %216, %205 : vector<8x64xf32>
    %221 = arith.mulf %217, %219 : vector<8x64xf32>
    %222 = arith.addf %220, %221 : vector<8x64xf32>
    %223 = math.tanh %222 : vector<8x64xf32>
    %224 = arith.mulf %218, %223 : vector<8x64xf32>
    %c24_81 = arith.constant 24 : index
    %c0_82 = arith.constant 0 : index
    %225 = vector.load %arg10[%c24_81, %c0_82] : memref<64x256xf32, #tpu.memory_space<vmem>>, vector<8x256xf32>
    %226 = arith.truncf %224 : vector<8x64xf32> to vector<8x64xbf16>
    %cst_83 = arith.constant dense<0.000000e+00> : vector<8x256xf32>
    %227 = tpu.matmul %226, %175, %cst_83 {dimension_numbers = #tpu.dot_dimension_numbers<[1], [0], [0], [1], [0, 0, 1, 1], [], []>} : vector<8x64xbf16>, vector<64x256xbf16>, vector<8x256xf32> -> vector<8x256xf32>
    %228 = arith.addf %225, %227 : vector<8x256xf32>
    %229 = arith.mulf %228, %5 : vector<8x256xf32>
    %230 = math.tanh %229 : vector<8x256xf32>
    %231 = arith.mulf %230, %5 : vector<8x256xf32>
    %232 = arith.addf %231, %8 : vector<8x256xf32>
    %233 = vector.extract_strided_slice %232 {offsets = [0, 0], sizes = [8, 64], strides = [1, 1]} : vector<8x256xf32> to vector<8x64xf32>
    %234 = vector.extract_strided_slice %232 {offsets = [0, 64], sizes = [8, 64], strides = [1, 1]} : vector<8x256xf32> to vector<8x64xf32>
    %235 = vector.extract_strided_slice %232 {offsets = [0, 128], sizes = [8, 64], strides = [1, 1]} : vector<8x256xf32> to vector<8x64xf32>
    %236 = vector.extract_strided_slice %232 {offsets = [0, 192], sizes = [8, 64], strides = [1, 1]} : vector<8x256xf32> to vector<8x64xf32>
    %237 = arith.mulf %233, %222 : vector<8x64xf32>
    %238 = arith.mulf %234, %236 : vector<8x64xf32>
    %239 = arith.addf %237, %238 : vector<8x64xf32>
    %240 = math.tanh %239 : vector<8x64xf32>
    %241 = arith.mulf %235, %240 : vector<8x64xf32>
    %c32_84 = arith.constant 32 : index
    %c0_85 = arith.constant 0 : index
    %242 = vector.load %arg10[%c32_84, %c0_85] : memref<64x256xf32, #tpu.memory_space<vmem>>, vector<8x256xf32>
    %243 = arith.truncf %241 : vector<8x64xf32> to vector<8x64xbf16>
    %cst_86 = arith.constant dense<0.000000e+00> : vector<8x256xf32>
    %244 = tpu.matmul %243, %175, %cst_86 {dimension_numbers = #tpu.dot_dimension_numbers<[1], [0], [0], [1], [0, 0, 1, 1], [], []>} : vector<8x64xbf16>, vector<64x256xbf16>, vector<8x256xf32> -> vector<8x256xf32>
    %245 = arith.addf %242, %244 : vector<8x256xf32>
    %246 = arith.mulf %245, %5 : vector<8x256xf32>
    %247 = math.tanh %246 : vector<8x256xf32>
    %248 = arith.mulf %247, %5 : vector<8x256xf32>
    %249 = arith.addf %248, %8 : vector<8x256xf32>
    %250 = vector.extract_strided_slice %249 {offsets = [0, 0], sizes = [8, 64], strides = [1, 1]} : vector<8x256xf32> to vector<8x64xf32>
    %251 = vector.extract_strided_slice %249 {offsets = [0, 64], sizes = [8, 64], strides = [1, 1]} : vector<8x256xf32> to vector<8x64xf32>
    %252 = vector.extract_strided_slice %249 {offsets = [0, 128], sizes = [8, 64], strides = [1, 1]} : vector<8x256xf32> to vector<8x64xf32>
    %253 = vector.extract_strided_slice %249 {offsets = [0, 192], sizes = [8, 64], strides = [1, 1]} : vector<8x256xf32> to vector<8x64xf32>
    %254 = arith.mulf %250, %239 : vector<8x64xf32>
    %255 = arith.mulf %251, %253 : vector<8x64xf32>
    %256 = arith.addf %254, %255 : vector<8x64xf32>
    %257 = math.tanh %256 : vector<8x64xf32>
    %258 = arith.mulf %252, %257 : vector<8x64xf32>
    %c40_87 = arith.constant 40 : index
    %c0_88 = arith.constant 0 : index
    %259 = vector.load %arg10[%c40_87, %c0_88] : memref<64x256xf32, #tpu.memory_space<vmem>>, vector<8x256xf32>
    %260 = arith.truncf %258 : vector<8x64xf32> to vector<8x64xbf16>
    %cst_89 = arith.constant dense<0.000000e+00> : vector<8x256xf32>
    %261 = tpu.matmul %260, %175, %cst_89 {dimension_numbers = #tpu.dot_dimension_numbers<[1], [0], [0], [1], [0, 0, 1, 1], [], []>} : vector<8x64xbf16>, vector<64x256xbf16>, vector<8x256xf32> -> vector<8x256xf32>
    %262 = arith.addf %259, %261 : vector<8x256xf32>
    %263 = arith.mulf %262, %5 : vector<8x256xf32>
    %264 = math.tanh %263 : vector<8x256xf32>
    %265 = arith.mulf %264, %5 : vector<8x256xf32>
    %266 = arith.addf %265, %8 : vector<8x256xf32>
    %267 = vector.extract_strided_slice %266 {offsets = [0, 0], sizes = [8, 64], strides = [1, 1]} : vector<8x256xf32> to vector<8x64xf32>
    %268 = vector.extract_strided_slice %266 {offsets = [0, 64], sizes = [8, 64], strides = [1, 1]} : vector<8x256xf32> to vector<8x64xf32>
    %269 = vector.extract_strided_slice %266 {offsets = [0, 128], sizes = [8, 64], strides = [1, 1]} : vector<8x256xf32> to vector<8x64xf32>
    %270 = vector.extract_strided_slice %266 {offsets = [0, 192], sizes = [8, 64], strides = [1, 1]} : vector<8x256xf32> to vector<8x64xf32>
    %271 = arith.mulf %267, %256 : vector<8x64xf32>
    %272 = arith.mulf %268, %270 : vector<8x64xf32>
    %273 = arith.addf %271, %272 : vector<8x64xf32>
    %274 = math.tanh %273 : vector<8x64xf32>
    %275 = arith.mulf %269, %274 : vector<8x64xf32>
    %c48_90 = arith.constant 48 : index
    %c0_91 = arith.constant 0 : index
    %276 = vector.load %arg10[%c48_90, %c0_91] : memref<64x256xf32, #tpu.memory_space<vmem>>, vector<8x256xf32>
    %277 = arith.truncf %275 : vector<8x64xf32> to vector<8x64xbf16>
    %cst_92 = arith.constant dense<0.000000e+00> : vector<8x256xf32>
    %278 = tpu.matmul %277, %175, %cst_92 {dimension_numbers = #tpu.dot_dimension_numbers<[1], [0], [0], [1], [0, 0, 1, 1], [], []>} : vector<8x64xbf16>, vector<64x256xbf16>, vector<8x256xf32> -> vector<8x256xf32>
    %279 = arith.addf %276, %278 : vector<8x256xf32>
    %280 = arith.mulf %279, %5 : vector<8x256xf32>
    %281 = math.tanh %280 : vector<8x256xf32>
    %282 = arith.mulf %281, %5 : vector<8x256xf32>
    %283 = arith.addf %282, %8 : vector<8x256xf32>
    %284 = vector.extract_strided_slice %283 {offsets = [0, 0], sizes = [8, 64], strides = [1, 1]} : vector<8x256xf32> to vector<8x64xf32>
    %285 = vector.extract_strided_slice %283 {offsets = [0, 64], sizes = [8, 64], strides = [1, 1]} : vector<8x256xf32> to vector<8x64xf32>
    %286 = vector.extract_strided_slice %283 {offsets = [0, 128], sizes = [8, 64], strides = [1, 1]} : vector<8x256xf32> to vector<8x64xf32>
    %287 = vector.extract_strided_slice %283 {offsets = [0, 192], sizes = [8, 64], strides = [1, 1]} : vector<8x256xf32> to vector<8x64xf32>
    %288 = arith.mulf %284, %273 : vector<8x64xf32>
    %289 = arith.mulf %285, %287 : vector<8x64xf32>
    %290 = arith.addf %288, %289 : vector<8x64xf32>
    %291 = math.tanh %290 : vector<8x64xf32>
    %292 = arith.mulf %286, %291 : vector<8x64xf32>
    %c56_93 = arith.constant 56 : index
    %c0_94 = arith.constant 0 : index
    %293 = vector.load %arg10[%c56_93, %c0_94] : memref<64x256xf32, #tpu.memory_space<vmem>>, vector<8x256xf32>
    %294 = arith.truncf %292 : vector<8x64xf32> to vector<8x64xbf16>
    %cst_95 = arith.constant dense<0.000000e+00> : vector<8x256xf32>
    %295 = tpu.matmul %294, %175, %cst_95 {dimension_numbers = #tpu.dot_dimension_numbers<[1], [0], [0], [1], [0, 0, 1, 1], [], []>} : vector<8x64xbf16>, vector<64x256xbf16>, vector<8x256xf32> -> vector<8x256xf32>
    %296 = arith.addf %293, %295 : vector<8x256xf32>
    %297 = arith.mulf %296, %5 : vector<8x256xf32>
    %298 = math.tanh %297 : vector<8x256xf32>
    %299 = arith.mulf %298, %5 : vector<8x256xf32>
    %300 = arith.addf %299, %8 : vector<8x256xf32>
    %301 = vector.extract_strided_slice %300 {offsets = [0, 0], sizes = [8, 64], strides = [1, 1]} : vector<8x256xf32> to vector<8x64xf32>
    %302 = vector.extract_strided_slice %300 {offsets = [0, 64], sizes = [8, 64], strides = [1, 1]} : vector<8x256xf32> to vector<8x64xf32>
    %303 = vector.extract_strided_slice %300 {offsets = [0, 128], sizes = [8, 64], strides = [1, 1]} : vector<8x256xf32> to vector<8x64xf32>
    %304 = vector.extract_strided_slice %300 {offsets = [0, 192], sizes = [8, 64], strides = [1, 1]} : vector<8x256xf32> to vector<8x64xf32>
    %305 = arith.mulf %301, %290 : vector<8x64xf32>
    %306 = arith.mulf %302, %304 : vector<8x64xf32>
    %307 = arith.addf %305, %306 : vector<8x64xf32>
    %308 = math.tanh %307 : vector<8x64xf32>
    %309 = arith.mulf %303, %308 : vector<8x64xf32>
    %310 = tpu.iota {dimensions = array<i32: 1>} : vector<8x64xi32>
    %c32_i32 = arith.constant 32 : i32
    %311 = vector.broadcast %c32_i32 : i32 to vector<8x64xi32>
    %312 = arith.cmpi slt, %310, %311 : vector<8x64xi32>
    %313 = arith.select %312, %190, %309 : vector<8x64xi1>, vector<8x64xf32>
    %314 = arith.select %312, %207, %292 : vector<8x64xi1>, vector<8x64xf32>
    %315 = arith.select %312, %224, %275 : vector<8x64xi1>, vector<8x64xf32>
    %316 = arith.select %312, %241, %258 : vector<8x64xi1>, vector<8x64xf32>
    %317 = arith.select %312, %258, %241 : vector<8x64xi1>, vector<8x64xf32>
    %318 = arith.select %312, %275, %224 : vector<8x64xi1>, vector<8x64xf32>
    %319 = arith.select %312, %292, %207 : vector<8x64xi1>, vector<8x64xf32>
    %320 = arith.select %312, %309, %190 : vector<8x64xi1>, vector<8x64xf32>
    %321 = vector.shape_cast %313 : vector<8x64xf32> to vector<1x8x64xf32>
    %322 = vector.shape_cast %314 : vector<8x64xf32> to vector<1x8x64xf32>
    %323 = vector.shape_cast %315 : vector<8x64xf32> to vector<1x8x64xf32>
    %324 = vector.shape_cast %316 : vector<8x64xf32> to vector<1x8x64xf32>
    %325 = vector.shape_cast %317 : vector<8x64xf32> to vector<1x8x64xf32>
    %326 = vector.shape_cast %318 : vector<8x64xf32> to vector<1x8x64xf32>
    %327 = vector.shape_cast %319 : vector<8x64xf32> to vector<1x8x64xf32>
    %328 = vector.shape_cast %320 : vector<8x64xf32> to vector<1x8x64xf32>
    %329 = tpu.concatenate %321, %322, %323, %324, %325, %326, %327, %328 in 0 : vector<1x8x64xf32>, vector<1x8x64xf32>, vector<1x8x64xf32>, vector<1x8x64xf32>, vector<1x8x64xf32>, vector<1x8x64xf32>, vector<1x8x64xf32>, vector<1x8x64xf32> -> vector<8x8x64xf32>
    %c0_96 = arith.constant 0 : index
    %c0_97 = arith.constant 0 : index
    %330 = vector.load %arg7[%c0_96, %c0_97] : memref<1x64xf32, #tpu.memory_space<vmem>>, vector<1x64xf32>
    %c0_98 = arith.constant 0 : index
    %c0_99 = arith.constant 0 : index
    %331 = memref.load %arg8[%c0_98, %c0_99] : memref<1x1xf32, #tpu.memory_space<smem>>
    %332 = vector.shape_cast %330 : vector<1x64xf32> to vector<1x1x64xf32>
    %333 = vector.broadcast %332 : vector<1x1x64xf32> to vector<8x8x64xf32>
    %334 = arith.mulf %329, %333 : vector<8x8x64xf32>
    %cst_100 = arith.constant dense<0.000000e+00> : vector<8x8xf32>
    %335 = vector.multi_reduction <add>, %334, %cst_100 [2] : vector<8x8x64xf32> to vector<8x8xf32>
    %336 = vector.shape_cast %335 : vector<8x8xf32> to vector<8x8x1xf32>
    %337 = vector.broadcast %331 : f32 to vector<8x8x1xf32>
    %338 = arith.addf %336, %337 : vector<8x8x1xf32>
    %cst_101 = arith.constant dense<0xFF800000> : vector<8x1xf32>
    %339 = vector.multi_reduction <maximumf>, %338, %cst_101 [0] : vector<8x8x1xf32> to vector<8x1xf32>
    %340 = vector.shape_cast %339 : vector<8x1xf32> to vector<1x8x1xf32>
    %341 = vector.broadcast %340 : vector<1x8x1xf32> to vector<8x8x1xf32>
    %342 = arith.subf %338, %341 : vector<8x8x1xf32>
    %343 = math.exp %342 : vector<8x8x1xf32>
    %cst_102 = arith.constant dense<0.000000e+00> : vector<8x1xf32>
    %344 = vector.multi_reduction <add>, %343, %cst_102 [0] : vector<8x8x1xf32> to vector<8x1xf32>
    %345 = vector.shape_cast %344 : vector<8x1xf32> to vector<1x8x1xf32>
    %346 = tpu.reciprocal %345 {approx = true} : vector<1x8x1xf32> -> vector<1x8x1xf32>
    %347 = vector.broadcast %346 : vector<1x8x1xf32> to vector<8x8x1xf32>
    %348 = arith.mulf %343, %347 : vector<8x8x1xf32>
    %349 = vector.broadcast %348 : vector<8x8x1xf32> to vector<8x8x64xf32>
    %350 = arith.mulf %329, %349 : vector<8x8x64xf32>
    %cst_103 = arith.constant dense<0.000000e+00> : vector<8x64xf32>
    %351 = vector.multi_reduction <add>, %350, %cst_103 [0] : vector<8x8x64xf32> to vector<8x64xf32>
    %c0_104 = arith.constant 0 : index
    %c0_105 = arith.constant 0 : index
    %352 = vector.load %arg9[%c0_104, %c0_105] : memref<8x128xf32, #tpu.memory_space<vmem>>, vector<8x64xf32>
    tpu.vector_store %arg9[%c0_104, %c0_105], %320 {strides = array<i32>} : memref<8x128xf32, #tpu.memory_space<vmem>>, vector<8x64xf32>,
    %c0_106 = arith.constant 0 : index
    %c64_107 = arith.constant 64 : index
    %353 = vector.load %arg9[%c0_106, %c64_107] : memref<8x128xf32, #tpu.memory_space<vmem>>, vector<8x64xf32>
    tpu.vector_store %arg9[%c0_106, %c64_107], %351 {strides = array<i32>} : memref<8x128xf32, #tpu.memory_space<vmem>>, vector<8x64xf32>,
    return
  }
}

</mosaic_0001>

<llo_original>
// kernel: history_attention_rnn_pallas.1
$region0: #{history_attention_rnn_pallas.1}
  #allocation0 [shape = 'u32[]', space=smem, size = 0x4, offset = 0x4, fixed_abs, tag = 'smem constant byte address 0x4 - core index']
  #allocation1 [shape = 'u32[72,128]{1,0:T(1,128)}', space=vmem, size = 0x9000, scoped, tag = 'internal scratch']
  #allocation2 [shape = 'f32[64,256]{1,0:T(8,128)}', space=vmem, size = 0x10000, scoped, tag = 'scratch operand']
  #allocation3 [shape = 'f32[64,128]{1,0:T(8,128)}', space=vmem, size = 0x8000, scoped, tag = 'scratch operand']
  #allocation4 [shape = 'f32[1,1]{1,0:T(1,128)S(6)}', space=smem, size = 0x200, scoped, tag = 'scoped memory for history_attention_rnn_pallas.1']
  %s0 = inlined_call_operand.vmem [shape: bf16[64,64], index: 0, kind: input, shape index: {}]
  %s1 = inlined_call_operand.vmem [shape: bf16[64,256], index: 1, kind: input, shape index: {}]
  %s2 = inlined_call_operand.vmem [shape: bf16[64,256], index: 2, kind: input, shape index: {}]
  %s3 = inlined_call_operand.vmem [shape: f32[1,256], index: 3, kind: input, shape index: {}]
  %s4 = inlined_call_operand.vmem [shape: bf16[128,256], index: 4, kind: input, shape index: {}]
  %s5 = inlined_call_operand.hbm [shape: bf16[64,256], index: 5, kind: input, shape index: {}]
  %s6 = inlined_call_operand.vmem [shape: f32[1,256], index: 6, kind: input, shape index: {}]
  %s7 = inlined_call_operand.vmem [shape: f32[1,64], index: 7, kind: input, shape index: {}]
  %s8 = inlined_call_operand.<no memory space> [shape: f32[1,1], index: 8, kind: input, shape index: {}]
  %s9 = inlined_call_operand.hbm [shape: f32[8,128], index: 9, kind: output, shape index: {}]
  %s10 = sld [smem:[#allocation0]]
  $region50: #{history_attention_rnn_pallas.1} parent=0
    _
  %s12 = ssub.s32 1, %s10
  %s13 = scalar_select 0, %s12, %s10
  %14 = sst [smem:[#allocation4]] %s8
  $region1: #{history_attention_rnn_pallas.1} parent=0
    #allocation5 [shape = 'u8[32768]{0}', space=vmem, size = 0x8000, scoped, tag = 'input window, operand 5, single buffered']
    #allocation6 [shape = 's32[1]{0}', space=sflag, size = 0x4, scoped, tag = 'scoped memory for history_attention_rnn_pallas.1']
    #allocation7 [shape = 's32[1]{0}', space=sflag, size = 0x4, scoped, tag = 'scoped memory for history_attention_rnn_pallas.1']
    #allocation8 [shape = 'u8[4096]{0}', space=vmem, size = 0x1000, scoped, tag = 'output window, operand 0, single buffered']
    %15 = vsyncpa [#allocation6], 0
    %16 = vsyncpa [#allocation7], 0
    // Predicated region
    $region2: #{history_attention_rnn_pallas.1} parent=1 // pred_check
      _
    $region3: #{history_attention_rnn_pallas.1} parent=1 // pred_check_branch
      %18 = sbr.rel (0) target = $region5
    $region4: #{history_attention_rnn_pallas.1} parent=1 // pred_region
      _
    $region5: #{history_attention_rnn_pallas.1} parent=1 // pred_fallthru
      _
    // Predicated region
    $region6: #{history_attention_rnn_pallas.1} parent=1 // pred_check
      _
    $region7: #{history_attention_rnn_pallas.1} parent=1 // pred_check_branch
      %20 = sbr.rel (0) target = $region9
    $region8: #{history_attention_rnn_pallas.1} parent=1 // pred_region
      _
    $region9: #{history_attention_rnn_pallas.1} parent=1 // pred_fallthru
      _
    // Predicated region
    $region10: #{history_attention_rnn_pallas.1} parent=1 // pred_check
      _
    $region11: #{history_attention_rnn_pallas.1} parent=1 // pred_check_branch
      %22 = sbr.rel (0) target = $region13
    $region12: #{history_attention_rnn_pallas.1} parent=1 // pred_region
      _
    $region13: #{history_attention_rnn_pallas.1} parent=1 // pred_fallthru
      _
    // Predicated region
    $region14: #{history_attention_rnn_pallas.1} parent=1 // pred_check
      _
    $region15: #{history_attention_rnn_pallas.1} parent=1 // pred_check_branch
      %24 = sbr.rel (0) target = $region17
    $region16: #{history_attention_rnn_pallas.1} parent=1 // pred_region
      _
    $region17: #{history_attention_rnn_pallas.1} parent=1 // pred_fallthru
      _
    // Predicated region
    $region18: #{history_attention_rnn_pallas.1} parent=1 // pred_check
      _
    $region19: #{history_attention_rnn_pallas.1} parent=1 // pred_check_branch
      %26 = sbr.rel (0) target = $region21
    $region20: #{history_attention_rnn_pallas.1} parent=1 // pred_region
      _
    $region21: #{history_attention_rnn_pallas.1} parent=1 // pred_fallthru
      _
    // Predicated region
    $region22: #{history_attention_rnn_pallas.1} parent=1 // pred_check
      _
    $region23: #{history_attention_rnn_pallas.1} parent=1 // pred_check_branch
      %28 = sbr.rel (0) target = $region25
    $region24: #{history_attention_rnn_pallas.1} parent=1 // pred_region
      %30 = vsyncadd [#allocation6], 0
      %s31 = sshll.u32 %s5, 4
      %s32 = int_to_ptr.hbm [resolvable:$true] %s31
      %s33 = sshll.u32 [#allocation5], 4
      %s34 = int_to_ptr.vmem [resolvable:$true] %s33
      %39 = dma.hbm_to_vmem [thread:$0]  %s32, 1024, %s34, [#allocation6], 128, 128, 8
    $region25: #{history_attention_rnn_pallas.1} parent=1 // pred_fallthru
      _
    // Predicated region
    $region26: #{history_attention_rnn_pallas.1} parent=1 // pred_check
      _
    $region27: #{history_attention_rnn_pallas.1} parent=1 // pred_check_branch
      %41 = sbr.rel (0) target = $region29
    $region28: #{history_attention_rnn_pallas.1} parent=1 // pred_region
      _
    $region29: #{history_attention_rnn_pallas.1} parent=1 // pred_fallthru
      _
    // Predicated region
    $region30: #{history_attention_rnn_pallas.1} parent=1 // pred_check
      _
    $region31: #{history_attention_rnn_pallas.1} parent=1 // pred_check_branch
      %43 = sbr.rel (0) target = $region33
    $region32: #{history_attention_rnn_pallas.1} parent=1 // pred_region
      _
    $region33: #{history_attention_rnn_pallas.1} parent=1 // pred_fallthru
      _
    // Predicated region
    $region34: #{history_attention_rnn_pallas.1} parent=1 // pred_check
      _
    $region35: #{history_attention_rnn_pallas.1} parent=1 // pred_check_branch
      %45 = sbr.rel (0) target = $region37
    $region36: #{history_attention_rnn_pallas.1} parent=1 // pred_region
      _
    $region37: #{history_attention_rnn_pallas.1} parent=1 // pred_fallthru
      _
    // Predicated region
    $region38: #{history_attention_rnn_pallas.1} parent=1 // pred_check
      _
    $region39: #{history_attention_rnn_pallas.1} parent=1 // pred_check_branch
      %47 = sbr.rel (0) target = $region41
    $region40: #{history_attention_rnn_pallas.1} parent=1 // pred_region
      %49 = dma.done [#allocation6], 1024
    $region41: #{history_attention_rnn_pallas.1} parent=1 // pred_fallthru
      _
    %v51 = vlaneseq
    %v52 = vand.u32 %v51, 127
    %v53 = vadd.s32 %v52, 128
    %vm54 = vcmp.ge.s32.totalorder %v52, 192
    %vm55 = vcmp.ge.s32.totalorder %v53, 192
    %v56 = vsel %vm54, 1.0, 0.5
    %v57 = vsel %vm55, 1.0, 0.5
    %v58 = vsel %vm54, 0.0, 0.5
    %v59 = vsel %vm55, 0.0, 0.5
    %v60 = vld [vmem:[%s0] sm:$0xf]
    %v61 = vld [vmem:[%s0 + $0x4] sm:$0xf]
    %v62 = vld [vmem:[%s0 + $0x8] sm:$0xf]
    %v63 = vld [vmem:[%s0 + $0xc] sm:$0xf]
    %v64 = vld [vmem:[%s0 + $0x10] sm:$0xf]
    %v65 = vld [vmem:[%s0 + $0x14] sm:$0xf]
    %v66 = vld [vmem:[%s0 + $0x18] sm:$0xf]
    %v67 = vld [vmem:[%s0 + $0x1c] sm:$0xf]
    %v68 = vld [vmem:[%s1] sm:$0xff]
    %v69 = vld [vmem:[%s1 + $0x8] sm:$0xff]
    %v70 = vld [vmem:[%s1 + $0x10] sm:$0xff]
    %v71 = vld [vmem:[%s1 + $0x18] sm:$0xff]
    %v72 = vld [vmem:[%s1 + $0x20] sm:$0xff]
    %v73 = vld [vmem:[%s1 + $0x28] sm:$0xff]
    %v74 = vld [vmem:[%s1 + $0x30] sm:$0xff]
    %v75 = vld [vmem:[%s1 + $0x38] sm:$0xff]
    %v76 = vld [vmem:[%s3] sm:$0x3]
    %v78 = vperm.slane %v76, 0
    %v79 = vperm.slane %v76, 1
    %v90 = vunpack.c.l.b16 %v60
    %v91 = vunpack.c.l.b16 %v61
    %v92 = vunpack.c.l.b16 %v62
    %v93 = vunpack.c.l.b16 %v63
    %v94 = vunpack.c.l.b16 %v64
    %v95 = vunpack.c.l.b16 %v65
    %v96 = vunpack.c.l.b16 %v66
    %v97 = vunpack.c.l.b16 %v67
    %v98 = vpack.c.b16 %v91, %v90
    %v99 = vpack.c.b16 %v93, %v92
    %v100 = vpack.c.b16 %v95, %v94
    %v101 = vpack.c.b16 %v97, %v96
    %v110 = vunpack.c.l.b16 %v68
    %v111 = vunpack.c.h.b16 %v68
    %v112 = vunpack.c.l.b16 %v69
    %v113 = vunpack.c.h.b16 %v69
    %v114 = vunpack.c.l.b16 %v70
    %v115 = vunpack.c.h.b16 %v70
    %v116 = vunpack.c.l.b16 %v71
    %v117 = vunpack.c.h.b16 %v71
    %v118 = vunpack.c.l.b16 %v72
    %v119 = vunpack.c.h.b16 %v72
    %v120 = vunpack.c.l.b16 %v73
    %v121 = vunpack.c.h.b16 %v73
    %v122 = vunpack.c.l.b16 %v74
    %v123 = vunpack.c.h.b16 %v74
    %v124 = vunpack.c.l.b16 %v75
    %v125 = vunpack.c.h.b16 %v75
    %v126 = vpack.c.b16 %v112, %v110
    %v127 = vpack.c.b16 %v113, %v111
    %v128 = vpack.c.b16 %v116, %v114
    %v129 = vpack.c.b16 %v117, %v115
    %v130 = vpack.c.b16 %v120, %v118
    %v131 = vpack.c.b16 %v121, %v119
    %v132 = vpack.c.b16 %v124, %v122
    %v133 = vpack.c.b16 %v125, %v123
    %vm142 = vcmask 523264
    %v144 = vsel %vm142, %v98, 0
    %v147 = vsel %vm142, %v99, 0
    %v150 = vsel %vm142, %v100, 0
    %v153 = vsel %vm142, %v101, 0
    %155 = vmatpush.bf16.msra.mxu0 0
    %156 = vmatpush.bf16.msra.mxu0 0
    %157 = vmatpush.bf16.msra.mxu0 0
    %158 = vmatpush.bf16.msra.mxu0 0
    %159 = vmatpush.bf16.msra.mxu0 %v132
    %160 = vmatpush.bf16.msra.mxu0 %v130
    %161 = vmatpush.bf16.msra.mxu0 %v128
    %162 = vmatpush.bf16.msra.mxu0 %v126
    %163 = vmatmul.bf16.gmra.mxu0 %v144
    %v164 = vpop.f32.mrf.mxu0
    %v165 = vadd.f32 %v78, %v164
    %v166 = vpop.f32.mrf.mxu0
    %v167 = vadd.f32 %v78, %v166
    %168 = vmatmul.bf16.gmra.mxu0 %v147
    %v169 = vpop.f32.mrf.mxu0
    %v170 = vadd.f32 %v78, %v169
    %v171 = vpop.f32.mrf.mxu0
    %v172 = vadd.f32 %v78, %v171
    %173 = vmatmul.bf16.gmra.mxu0 %v150
    %v174 = vpop.f32.mrf.mxu0
    %v175 = vadd.f32 %v78, %v174
    %v176 = vpop.f32.mrf.mxu0
    %v177 = vadd.f32 %v78, %v176
    %178 = vmatmul.bf16.gmra.mxu0 %v153
    %v179 = vpop.f32.mrf.mxu0
    %v180 = vadd.f32 %v78, %v179
    %v181 = vpop.f32.mrf.mxu0
    %v182 = vadd.f32 %v78, %v181
    %183 = vdwg.mxu0
    %184 = vmatpush.bf16.msra.mxu0 0
    %185 = vmatpush.bf16.msra.mxu0 0
    %186 = vmatpush.bf16.msra.mxu0 0
    %187 = vmatpush.bf16.msra.mxu0 0
    %188 = vmatpush.bf16.msra.mxu0 %v133
    %189 = vmatpush.bf16.msra.mxu0 %v131
    %190 = vmatpush.bf16.msra.mxu0 %v129
    %191 = vmatpush.bf16.msra.mxu0 %v127
    %192 = vmatmul.bf16.gmra.mxu0 %v144
    %v193 = vpop.f32.mrf.mxu0
    %v194 = vadd.f32 %v79, %v193
    %v195 = vpop.f32.mrf.mxu0
    %v196 = vadd.f32 %v79, %v195
    %197 = vmatmul.bf16.gmra.mxu0 %v147
    %v198 = vpop.f32.mrf.mxu0
    %v199 = vadd.f32 %v79, %v198
    %v200 = vpop.f32.mrf.mxu0
    %v201 = vadd.f32 %v79, %v200
    %202 = vmatmul.bf16.gmra.mxu0 %v150
    %v203 = vpop.f32.mrf.mxu0
    %v204 = vadd.f32 %v79, %v203
    %v205 = vpop.f32.mrf.mxu0
    %v206 = vadd.f32 %v79, %v205
    %207 = vmatmul.bf16.gmra.mxu0 %v153
    %v208 = vpop.f32.mrf.mxu0
    %v209 = vadd.f32 %v79, %v208
    %v210 = vpop.f32.mrf.mxu0
    %v211 = vadd.f32 %v79, %v210
    %212 = vdwg.mxu0
    %213 = vst [vmem:[#allocation2] sm:$0xff] %v165
    %214 = vst [vmem:[#allocation2 + $0x8] sm:$0xff] %v194
    %215 = vst [vmem:[#allocation2 + $0x10] sm:$0xff] %v167
    %216 = vst [vmem:[#allocation2 + $0x18] sm:$0xff] %v196
    %217 = vst [vmem:[#allocation2 + $0x20] sm:$0xff] %v170
    %218 = vst [vmem:[#allocation2 + $0x28] sm:$0xff] %v199
    %219 = vst [vmem:[#allocation2 + $0x30] sm:$0xff] %v172
    %220 = vst [vmem:[#allocation2 + $0x38] sm:$0xff] %v201
    %221 = vst [vmem:[#allocation2 + $0x40] sm:$0xff] %v175
    %222 = vst [vmem:[#allocation2 + $0x48] sm:$0xff] %v204
    %223 = vst [vmem:[#allocation2 + $0x50] sm:$0xff] %v177
    %224 = vst [vmem:[#allocation2 + $0x58] sm:$0xff] %v206
    %225 = vst [vmem:[#allocation2 + $0x60] sm:$0xff] %v180
    %226 = vst [vmem:[#allocation2 + $0x68] sm:$0xff] %v209
    %227 = vst [vmem:[#allocation2 + $0x70] sm:$0xff] %v182
    %228 = vst [vmem:[#allocation2 + $0x78] sm:$0xff] %v211
    %v229 = vld [vmem:[%s2] sm:$0xff]
    %v230 = vld [vmem:[%s2 + $0x8] sm:$0xff]
    %v231 = vld [vmem:[%s2 + $0x10] sm:$0xff]
    %v232 = vld [vmem:[%s2 + $0x18] sm:$0xff]
    %v233 = vld [vmem:[%s2 + $0x20] sm:$0xff]
    %v234 = vld [vmem:[%s2 + $0x28] sm:$0xff]
    %v235 = vld [vmem:[%s2 + $0x30] sm:$0xff]
    %v236 = vld [vmem:[%s2 + $0x38] sm:$0xff]
    %v237 = vld [vmem:[#allocation2] sm:$0xff]
    %v238 = vld [vmem:[#allocation2 + $0x8] sm:$0xff]
    %v239 = vmul.f32 %v237, %v56
    %v240 = vmul.f32 %v238, %v57
    %v241 = vtanh.pop %v239
    %v242 = vtanh.pop %v240
    %v243 = vmul.f32 %v241, %v56
    %v244 = vmul.f32 %v242, %v57
    %v245 = vadd.f32 %v243, %v58
    %v246 = vadd.f32 %v244, %v59
    %v247 = vmul.f32 %v245, 0.0
    %v248 = vmul.f32 %v245, %v246
    %250 = vrot.lane.b32.xlu0 %v248, 64
    %v251 = vpop.permute.xlu0 %250
    %v253 = vadd.f32 %v247, %v251
    %v254 = vtanh.pop %v253
    %v255 = vmul.f32 %v246, %v254
    %v256 = vld [vmem:[#allocation2 + $0x10] sm:$0xff]
    %v257 = vld [vmem:[#allocation2 + $0x18] sm:$0xff]
    %v258 = vpack.c.bf16 %v255, %v255
    %v267 = vunpack.c.l.b16 %v229
    %v268 = vunpack.c.h.b16 %v229
    %v269 = vunpack.c.l.b16 %v230
    %v270 = vunpack.c.h.b16 %v230
    %v271 = vunpack.c.l.b16 %v231
    %v272 = vunpack.c.h.b16 %v231
    %v273 = vunpack.c.l.b16 %v232
    %v274 = vunpack.c.h.b16 %v232
    %v275 = vunpack.c.l.b16 %v233
    %v276 = vunpack.c.h.b16 %v233
    %v277 = vunpack.c.l.b16 %v234
    %v278 = vunpack.c.h.b16 %v234
    %v279 = vunpack.c.l.b16 %v235
    %v280 = vunpack.c.h.b16 %v235
    %v281 = vunpack.c.l.b16 %v236
    %v282 = vunpack.c.h.b16 %v236
    %v283 = vpack.c.b16 %v269, %v267
    %v284 = vpack.c.b16 %v270, %v268
    %v285 = vpack.c.b16 %v273, %v271
    %v286 = vpack.c.b16 %v274, %v272
    %v287 = vpack.c.b16 %v277, %v275
    %v288 = vpack.c.b16 %v278, %v276
    %v289 = vpack.c.b16 %v281, %v279
    %v290 = vpack.c.b16 %v282, %v280
    %v300 = vsel %vm142, %v258, 0
    %302 = vmatpush.bf16.msra.mxu0 0
    %303 = vmatpush.bf16.msra.mxu0 0
    %304 = vmatpush.bf16.msra.mxu0 0
    %305 = vmatpush.bf16.msra.mxu0 0
    %306 = vmatpush.bf16.msra.mxu0 %v289
    %307 = vmatpush.bf16.msra.mxu0 %v287
    %308 = vmatpush.bf16.msra.mxu0 %v285
    %309 = vmatpush.bf16.msra.mxu0 %v283
    %310 = vmatmul.bf16.gmra.mxu0 %v300
    %v311 = vpop.f32.mrf.mxu0
    %v312 = vadd.f32 0.0, %v311
    %v313 = vpop.f32.mrf.mxu0
    %314 = vdwg.mxu0
    %315 = vmatpush.bf16.msra.mxu0 0
    %316 = vmatpush.bf16.msra.mxu0 0
    %317 = vmatpush.bf16.msra.mxu0 0
    %318 = vmatpush.bf16.msra.mxu0 0
    %319 = vmatpush.bf16.msra.mxu0 %v290
    %320 = vmatpush.bf16.msra.mxu0 %v288
    %321 = vmatpush.bf16.msra.mxu0 %v286
    %322 = vmatpush.bf16.msra.mxu0 %v284
    %323 = vmatmul.bf16.gmra.mxu0 %v300
    %v324 = vpop.f32.mrf.mxu0
    %v325 = vadd.f32 0.0, %v324
    %v326 = vpop.f32.mrf.mxu0
    %327 = vdwg.mxu0
    %v328 = vadd.f32 %v256, %v312
    %v329 = vadd.f32 %v257, %v325
    %v330 = vmul.f32 %v328, %v56
    %v331 = vmul.f32 %v329, %v57
    %v332 = vtanh.pop %v330
    %v333 = vtanh.pop %v331
    %v334 = vmul.f32 %v332, %v56
    %v335 = vmul.f32 %v333, %v57
    %v336 = vadd.f32 %v334, %v58
    %v337 = vadd.f32 %v335, %v59
    %v338 = vmul.f32 %v336, %v253
    %v339 = vmul.f32 %v336, %v337
    %341 = vrot.lane.b32.xlu0 %v339, 64
    %v342 = vpop.permute.xlu0 %341
    %v344 = vadd.f32 %v338, %v342
    %v345 = vtanh.pop %v344
    %v346 = vmul.f32 %v337, %v345
    %v347 = vld [vmem:[#allocation2 + $0x20] sm:$0xff]
    %v348 = vld [vmem:[#allocation2 + $0x28] sm:$0xff]
    %v349 = vpack.c.bf16 %v346, %v346
    %v351 = vsel %vm142, %v349, 0
    %353 = vmatpush.bf16.msra.mxu0 0
    %354 = vmatpush.bf16.msra.mxu0 0
    %355 = vmatpush.bf16.msra.mxu0 0
    %356 = vmatpush.bf16.msra.mxu0 0
    %357 = vmatpush.bf16.msra.mxu0 %v289
    %358 = vmatpush.bf16.msra.mxu0 %v287
    %359 = vmatpush.bf16.msra.mxu0 %v285
    %360 = vmatpush.bf16.msra.mxu0 %v283
    %361 = vmatmul.bf16.gmra.mxu0 %v351
    %v362 = vpop.f32.mrf.mxu0
    %v363 = vadd.f32 0.0, %v362
    %v364 = vpop.f32.mrf.mxu0
    %365 = vdwg.mxu0
    %366 = vmatpush.bf16.msra.mxu0 0
    %367 = vmatpush.bf16.msra.mxu0 0
    %368 = vmatpush.bf16.msra.mxu0 0
    %369 = vmatpush.bf16.msra.mxu0 0
    %370 = vmatpush.bf16.msra.mxu0 %v290
    %371 = vmatpush.bf16.msra.mxu0 %v288
    %372 = vmatpush.bf16.msra.mxu0 %v286
    %373 = vmatpush.bf16.msra.mxu0 %v284
    %374 = vmatmul.bf16.gmra.mxu0 %v351
    %v375 = vpop.f32.mrf.mxu0
    %v376 = vadd.f32 0.0, %v375
    %v377 = vpop.f32.mrf.mxu0
    %378 = vdwg.mxu0
    %v379 = vadd.f32 %v347, %v363
    %v380 = vadd.f32 %v348, %v376
    %v381 = vmul.f32 %v379, %v56
    %v382 = vmul.f32 %v380, %v57
    %v383 = vtanh.pop %v381
    %v384 = vtanh.pop %v382
    %v385 = vmul.f32 %v383, %v56
    %v386 = vmul.f32 %v384, %v57
    %v387 = vadd.f32 %v385, %v58
    %v388 = vadd.f32 %v386, %v59
    %v389 = vmul.f32 %v387, %v344
    %v390 = vmul.f32 %v387, %v388
    %392 = vrot.lane.b32.xlu0 %v390, 64
    %v393 = vpop.permute.xlu0 %392
    %v395 = vadd.f32 %v389, %v393
    %v396 = vtanh.pop %v395
    %v397 = vmul.f32 %v388, %v396
    %v398 = vld [vmem:[#allocation2 + $0x30] sm:$0xff]
    %v399 = vld [vmem:[#allocation2 + $0x38] sm:$0xff]
    %v400 = vpack.c.bf16 %v397, %v397
    %v402 = vsel %vm142, %v400, 0
    %404 = vmatpush.bf16.msra.mxu0 0
    %405 = vmatpush.bf16.msra.mxu0 0
    %406 = vmatpush.bf16.msra.mxu0 0
    %407 = vmatpush.bf16.msra.mxu0 0
    %408 = vmatpush.bf16.msra.mxu0 %v289
    %409 = vmatpush.bf16.msra.mxu0 %v287
    %410 = vmatpush.bf16.msra.mxu0 %v285
    %411 = vmatpush.bf16.msra.mxu0 %v283
    %412 = vmatmul.bf16.gmra.mxu0 %v402
    %v413 = vpop.f32.mrf.mxu0
    %v414 = vadd.f32 0.0, %v413
    %v415 = vpop.f32.mrf.mxu0
    %416 = vdwg.mxu0
    %417 = vmatpush.bf16.msra.mxu0 0
    %418 = vmatpush.bf16.msra.mxu0 0
    %419 = vmatpush.bf16.msra.mxu0 0
    %420 = vmatpush.bf16.msra.mxu0 0
    %421 = vmatpush.bf16.msra.mxu0 %v290
    %422 = vmatpush.bf16.msra.mxu0 %v288
    %423 = vmatpush.bf16.msra.mxu0 %v286
    %424 = vmatpush.bf16.msra.mxu0 %v284
    %425 = vmatmul.bf16.gmra.mxu0 %v402
    %v426 = vpop.f32.mrf.mxu0
    %v427 = vadd.f32 0.0, %v426
    %v428 = vpop.f32.mrf.mxu0
    %429 = vdwg.mxu0
    %v430 = vadd.f32 %v398, %v414
    %v431 = vadd.f32 %v399, %v427
    %v432 = vmul.f32 %v430, %v56
    %v433 = vmul.f32 %v431, %v57
    %v434 = vtanh.pop %v432
    %v435 = vtanh.pop %v433
    %v436 = vmul.f32 %v434, %v56
    %v437 = vmul.f32 %v435, %v57
    %v438 = vadd.f32 %v436, %v58
    %v439 = vadd.f32 %v437, %v59
    %v440 = vmul.f32 %v438, %v395
    %v441 = vmul.f32 %v438, %v439
    %443 = vrot.lane.b32.xlu0 %v441, 64
    %v444 = vpop.permute.xlu0 %443
    %v446 = vadd.f32 %v440, %v444
    %v447 = vtanh.pop %v446
    %v448 = vmul.f32 %v439, %v447
    %v449 = vld [vmem:[#allocation2 + $0x40] sm:$0xff]
    %v450 = vld [vmem:[#allocation2 + $0x48] sm:$0xff]
    %v451 = vpack.c.bf16 %v448, %v448
    %v453 = vsel %vm142, %v451, 0
    %455 = vmatpush.bf16.msra.mxu0 0
    %456 = vmatpush.bf16.msra.mxu0 0
    %457 = vmatpush.bf16.msra.mxu0 0
    %458 = vmatpush.bf16.msra.mxu0 0
    %459 = vmatpush.bf16.msra.mxu0 %v289
    %460 = vmatpush.bf16.msra.mxu0 %v287
    %461 = vmatpush.bf16.msra.mxu0 %v285
    %462 = vmatpush.bf16.msra.mxu0 %v283
    %463 = vmatmul.bf16.gmra.mxu0 %v453
    %v464 = vpop.f32.mrf.mxu0
    %v465 = vadd.f32 0.0, %v464
    %v466 = vpop.f32.mrf.mxu0
    %467 = vdwg.mxu0
    %468 = vmatpush.bf16.msra.mxu0 0
    %469 = vmatpush.bf16.msra.mxu0 0
    %470 = vmatpush.bf16.msra.mxu0 0
    %471 = vmatpush.bf16.msra.mxu0 0
    %472 = vmatpush.bf16.msra.mxu0 %v290
    %473 = vmatpush.bf16.msra.mxu0 %v288
    %474 = vmatpush.bf16.msra.mxu0 %v286
    %475 = vmatpush.bf16.msra.mxu0 %v284
    %476 = vmatmul.bf16.gmra.mxu0 %v453
    %v477 = vpop.f32.mrf.mxu0
    %v478 = vadd.f32 0.0, %v477
    %v479 = vpop.f32.mrf.mxu0
    %480 = vdwg.mxu0
    %v481 = vadd.f32 %v449, %v465
    %v482 = vadd.f32 %v450, %v478
    %v483 = vmul.f32 %v481, %v56
    %v484 = vmul.f32 %v482, %v57
    %v485 = vtanh.pop %v483
    %v486 = vtanh.pop %v484
    %v487 = vmul.f32 %v485, %v56
    %v488 = vmul.f32 %v486, %v57
    %v489 = vadd.f32 %v487, %v58
    %v490 = vadd.f32 %v488, %v59
    %v491 = vmul.f32 %v489, %v446
    %v492 = vmul.f32 %v489, %v490
    %494 = vrot.lane.b32.xlu0 %v492, 64
    %v495 = vpop.permute.xlu0 %494
    %v497 = vadd.f32 %v491, %v495
    %v498 = vtanh.pop %v497
    %v499 = vmul.f32 %v490, %v498
    %v500 = vld [vmem:[#allocation2 + $0x50] sm:$0xff]
    %v501 = vld [vmem:[#allocation2 + $0x58] sm:$0xff]
    %v502 = vpack.c.bf16 %v499, %v499
    %v504 = vsel %vm142, %v502, 0
    %506 = vmatpush.bf16.msra.mxu0 0
    %507 = vmatpush.bf16.msra.mxu0 0
    %508 = vmatpush.bf16.msra.mxu0 0
    %509 = vmatpush.bf16.msra.mxu0 0
    %510 = vmatpush.bf16.msra.mxu0 %v289
    %511 = vmatpush.bf16.msra.mxu0 %v287
    %512 = vmatpush.bf16.msra.mxu0 %v285
    %513 = vmatpush.bf16.msra.mxu0 %v283
    %514 = vmatmul.bf16.gmra.mxu0 %v504
    %v515 = vpop.f32.mrf.mxu0
    %v516 = vadd.f32 0.0, %v515
    %v517 = vpop.f32.mrf.mxu0
    %518 = vdwg.mxu0
    %519 = vmatpush.bf16.msra.mxu0 0
    %520 = vmatpush.bf16.msra.mxu0 0
    %521 = vmatpush.bf16.msra.mxu0 0
    %522 = vmatpush.bf16.msra.mxu0 0
    %523 = vmatpush.bf16.msra.mxu0 %v290
    %524 = vmatpush.bf16.msra.mxu0 %v288
    %525 = vmatpush.bf16.msra.mxu0 %v286
    %526 = vmatpush.bf16.msra.mxu0 %v284
    %527 = vmatmul.bf16.gmra.mxu0 %v504
    %v528 = vpop.f32.mrf.mxu0
    %v529 = vadd.f32 0.0, %v528
    %v530 = vpop.f32.mrf.mxu0
    %531 = vdwg.mxu0
    %v532 = vadd.f32 %v500, %v516
    %v533 = vadd.f32 %v501, %v529
    %v534 = vmul.f32 %v532, %v56
    %v535 = vmul.f32 %v533, %v57
    %v536 = vtanh.pop %v534
    %v537 = vtanh.pop %v535
    %v538 = vmul.f32 %v536, %v56
    %v539 = vmul.f32 %v537, %v57
    %v540 = vadd.f32 %v538, %v58
    %v541 = vadd.f32 %v539, %v59
    %v542 = vmul.f32 %v540, %v497
    %v543 = vmul.f32 %v540, %v541
    %545 = vrot.lane.b32.xlu0 %v543, 64
    %v546 = vpop.permute.xlu0 %545
    %v548 = vadd.f32 %v542, %v546
    %v549 = vtanh.pop %v548
    %v550 = vmul.f32 %v541, %v549
    %v551 = vld [vmem:[#allocation2 + $0x60] sm:$0xff]
    %v552 = vld [vmem:[#allocation2 + $0x68] sm:$0xff]
    %v553 = vpack.c.bf16 %v550, %v550
    %v555 = vsel %vm142, %v553, 0
    %557 = vmatpush.bf16.msra.mxu0 0
    %558 = vmatpush.bf16.msra.mxu0 0
    %559 = vmatpush.bf16.msra.mxu0 0
    %560 = vmatpush.bf16.msra.mxu0 0
    %561 = vmatpush.bf16.msra.mxu0 %v289
    %562 = vmatpush.bf16.msra.mxu0 %v287
    %563 = vmatpush.bf16.msra.mxu0 %v285
    %564 = vmatpush.bf16.msra.mxu0 %v283
    %565 = vmatmul.bf16.gmra.mxu0 %v555
    %v566 = vpop.f32.mrf.mxu0
    %v567 = vadd.f32 0.0, %v566
    %v568 = vpop.f32.mrf.mxu0
    %569 = vdwg.mxu0
    %570 = vmatpush.bf16.msra.mxu0 0
    %571 = vmatpush.bf16.msra.mxu0 0
    %572 = vmatpush.bf16.msra.mxu0 0
    %573 = vmatpush.bf16.msra.mxu0 0
    %574 = vmatpush.bf16.msra.mxu0 %v290
    %575 = vmatpush.bf16.msra.mxu0 %v288
    %576 = vmatpush.bf16.msra.mxu0 %v286
    %577 = vmatpush.bf16.msra.mxu0 %v284
    %578 = vmatmul.bf16.gmra.mxu0 %v555
    %v579 = vpop.f32.mrf.mxu0
    %v580 = vadd.f32 0.0, %v579
    %v581 = vpop.f32.mrf.mxu0
    %582 = vdwg.mxu0
    %v583 = vadd.f32 %v551, %v567
    %v584 = vadd.f32 %v552, %v580
    %v585 = vmul.f32 %v583, %v56
    %v586 = vmul.f32 %v584, %v57
    %v587 = vtanh.pop %v585
    %v588 = vtanh.pop %v586
    %v589 = vmul.f32 %v587, %v56
    %v590 = vmul.f32 %v588, %v57
    %v591 = vadd.f32 %v589, %v58
    %v592 = vadd.f32 %v590, %v59
    %v593 = vmul.f32 %v591, %v548
    %v594 = vmul.f32 %v591, %v592
    %596 = vrot.lane.b32.xlu0 %v594, 64
    %v597 = vpop.permute.xlu0 %596
    %v599 = vadd.f32 %v593, %v597
    %v600 = vtanh.pop %v599
    %v601 = vmul.f32 %v592, %v600
    %v602 = vld [vmem:[#allocation2 + $0x70] sm:$0xff]
    %v603 = vld [vmem:[#allocation2 + $0x78] sm:$0xff]
    %v604 = vpack.c.bf16 %v601, %v601
    %v606 = vsel %vm142, %v604, 0
    %608 = vmatpush.bf16.msra.mxu0 0
    %609 = vmatpush.bf16.msra.mxu0 0
    %610 = vmatpush.bf16.msra.mxu0 0
    %611 = vmatpush.bf16.msra.mxu0 0
    %612 = vmatpush.bf16.msra.mxu0 %v289
    %613 = vmatpush.bf16.msra.mxu0 %v287
    %614 = vmatpush.bf16.msra.mxu0 %v285
    %615 = vmatpush.bf16.msra.mxu0 %v283
    %616 = vmatmul.bf16.gmra.mxu0 %v606
    %v617 = vpop.f32.mrf.mxu0
    %v618 = vadd.f32 0.0, %v617
    %v619 = vpop.f32.mrf.mxu0
    %620 = vdwg.mxu0
    %621 = vmatpush.bf16.msra.mxu0 0
    %622 = vmatpush.bf16.msra.mxu0 0
    %623 = vmatpush.bf16.msra.mxu0 0
    %624 = vmatpush.bf16.msra.mxu0 0
    %625 = vmatpush.bf16.msra.mxu0 %v290
    %626 = vmatpush.bf16.msra.mxu0 %v288
    %627 = vmatpush.bf16.msra.mxu0 %v286
    %628 = vmatpush.bf16.msra.mxu0 %v284
    %629 = vmatmul.bf16.gmra.mxu0 %v606
    %v630 = vpop.f32.mrf.mxu0
    %v631 = vadd.f32 0.0, %v630
    %v632 = vpop.f32.mrf.mxu0
    %633 = vdwg.mxu0
    %v634 = vadd.f32 %v602, %v618
    %v635 = vadd.f32 %v603, %v631
    %v636 = vmul.f32 %v634, %v56
    %v637 = vmul.f32 %v635, %v57
    %v638 = vtanh.pop %v636
    %v639 = vtanh.pop %v637
    %v640 = vmul.f32 %v638, %v56
    %v641 = vmul.f32 %v639, %v57
    %v642 = vadd.f32 %v640, %v58
    %v643 = vadd.f32 %v641, %v59
    %v644 = vmul.f32 %v642, %v599
    %v645 = vmul.f32 %v642, %v643
    %647 = vrot.lane.b32.xlu0 %v645, 64
    %v648 = vpop.permute.xlu0 %647
    %v650 = vadd.f32 %v644, %v648
    %v651 = vtanh.pop %v650
    %v652 = vmul.f32 %v643, %v651
    %653 = vst.msk [vmem:[#allocation3] sm:$0xff] %vm142, %v255
    %655 = vrot.lane.b32.xlu0 %v652, 64
    %v656 = vpop.permute.xlu0 %655
    %vm658 = vcmask 1048064
    %659 = vst.msk [vmem:[#allocation3] sm:$0xff] %vm658, %v656
    %660 = vst.msk [vmem:[#allocation3 + $0x8] sm:$0xff] %vm142, %v346
    %662 = vrot.lane.b32.xlu0 %v601, 64
    %v663 = vpop.permute.xlu0 %662
    %665 = vst.msk [vmem:[#allocation3 + $0x8] sm:$0xff] %vm658, %v663
    %666 = vst.msk [vmem:[#allocation3 + $0x10] sm:$0xff] %vm142, %v397
    %668 = vrot.lane.b32.xlu0 %v550, 64
    %v669 = vpop.permute.xlu0 %668
    %671 = vst.msk [vmem:[#allocation3 + $0x10] sm:$0xff] %vm658, %v669
    %672 = vst.msk [vmem:[#allocation3 + $0x18] sm:$0xff] %vm142, %v448
    %674 = vrot.lane.b32.xlu0 %v499, 64
    %v675 = vpop.permute.xlu0 %674
    %677 = vst.msk [vmem:[#allocation3 + $0x18] sm:$0xff] %vm658, %v675
    %678 = vst.msk [vmem:[#allocation3 + $0x20] sm:$0xff] %vm142, %v499
    %680 = vrot.lane.b32.xlu0 %v448, 64
    %v681 = vpop.permute.xlu0 %680
    %683 = vst.msk [vmem:[#allocation3 + $0x20] sm:$0xff] %vm658, %v681
    %684 = vst.msk [vmem:[#allocation3 + $0x28] sm:$0xff] %vm142, %v550
    %686 = vrot.lane.b32.xlu0 %v397, 64
    %v687 = vpop.permute.xlu0 %686
    %689 = vst.msk [vmem:[#allocation3 + $0x28] sm:$0xff] %vm658, %v687
    %690 = vst.msk [vmem:[#allocation3 + $0x30] sm:$0xff] %vm142, %v601
    %692 = vrot.lane.b32.xlu0 %v346, 64
    %v693 = vpop.permute.xlu0 %692
    %695 = vst.msk [vmem:[#allocation3 + $0x30] sm:$0xff] %vm658, %v693
    %696 = vst.msk [vmem:[#allocation3 + $0x38] sm:$0xff] %vm142, %v652
    %698 = vrot.lane.b32.xlu0 %v255, 64
    %v699 = vpop.permute.xlu0 %698
    %701 = vst.msk [vmem:[#allocation3 + $0x38] sm:$0xff] %vm658, %v699
    %v702 = vld [vmem:[#allocation3] sm:$0xff]
    %v703 = vld [vmem:[#allocation3 + $0x8] sm:$0xff]
    %v704 = vld [vmem:[#allocation3 + $0x10] sm:$0xff]
    %v705 = vld [vmem:[#allocation3 + $0x18] sm:$0xff]
    %v706 = vld [vmem:[#allocation3 + $0x20] sm:$0xff]
    %v707 = vld [vmem:[#allocation3 + $0x28] sm:$0xff]
    %v708 = vld [vmem:[#allocation3 + $0x30] sm:$0xff]
    %v709 = vld [vmem:[#allocation3 + $0x38] sm:$0xff]
    %v710 = vpack.c.bf16 %v703, %v702
    %v711 = vpack.c.bf16 %v705, %v704
    %v712 = vpack.c.bf16 %v707, %v706
    %v713 = vpack.c.bf16 %v709, %v708
    %v714 = vld [vmem:[%s4] sm:$0xff]
    %v715 = vld [vmem:[%s4 + $0x8] sm:$0xff]
    %v716 = vld [vmem:[%s4 + $0x10] sm:$0xff]
    %v717 = vld [vmem:[%s4 + $0x18] sm:$0xff]
    %v718 = vld [vmem:[%s4 + $0x20] sm:$0xff]
    %v719 = vld [vmem:[%s4 + $0x28] sm:$0xff]
    %v720 = vld [vmem:[%s4 + $0x30] sm:$0xff]
    %v721 = vld [vmem:[%s4 + $0x38] sm:$0xff]
    %v722 = vld [vmem:[%s4 + $0x40] sm:$0xff]
    %v723 = vld [vmem:[%s4 + $0x48] sm:$0xff]
    %v724 = vld [vmem:[%s4 + $0x50] sm:$0xff]
    %v725 = vld [vmem:[%s4 + $0x58] sm:$0xff]
    %v726 = vld [vmem:[%s4 + $0x60] sm:$0xff]
    %v727 = vld [vmem:[%s4 + $0x68] sm:$0xff]
    %v728 = vld [vmem:[%s4 + $0x70] sm:$0xff]
    %v729 = vld [vmem:[%s4 + $0x78] sm:$0xff]
    %v730 = vld [vmem:[%s6] sm:$0x3]
    %v732 = vperm.slane %v730, 0
    %v733 = vperm.slane %v730, 1
    %v752 = vunpack.c.l.b16 %v714
    %v753 = vunpack.c.h.b16 %v714
    %v754 = vunpack.c.l.b16 %v715
    %v755 = vunpack.c.h.b16 %v715
    %v756 = vunpack.c.l.b16 %v716
    %v757 = vunpack.c.h.b16 %v716
    %v758 = vunpack.c.l.b16 %v717
    %v759 = vunpack.c.h.b16 %v717
    %v760 = vunpack.c.l.b16 %v718
    %v761 = vunpack.c.h.b16 %v718
    %v762 = vunpack.c.l.b16 %v719
    %v763 = vunpack.c.h.b16 %v719
    %v764 = vunpack.c.l.b16 %v720
    %v765 = vunpack.c.h.b16 %v720
    %v766 = vunpack.c.l.b16 %v721
    %v767 = vunpack.c.h.b16 %v721
    %v768 = vunpack.c.l.b16 %v722
    %v769 = vunpack.c.h.b16 %v722
    %v770 = vunpack.c.l.b16 %v723
    %v771 = vunpack.c.h.b16 %v723
    %v772 = vunpack.c.l.b16 %v724
    %v773 = vunpack.c.h.b16 %v724
    %v774 = vunpack.c.l.b16 %v725
    %v775 = vunpack.c.h.b16 %v725
    %v776 = vunpack.c.l.b16 %v726
    %v777 = vunpack.c.h.b16 %v726
    %v778 = vunpack.c.l.b16 %v727
    %v779 = vunpack.c.h.b16 %v727
    %v780 = vunpack.c.l.b16 %v728
    %v781 = vunpack.c.h.b16 %v728
    %v782 = vunpack.c.l.b16 %v729
    %v783 = vunpack.c.h.b16 %v729
    %v784 = vpack.c.b16 %v754, %v752
    %v785 = vpack.c.b16 %v755, %v753
    %v786 = vpack.c.b16 %v758, %v756
    %v787 = vpack.c.b16 %v759, %v757
    %v788 = vpack.c.b16 %v762, %v760
    %v789 = vpack.c.b16 %v763, %v761
    %v790 = vpack.c.b16 %v766, %v764
    %v791 = vpack.c.b16 %v767, %v765
    %v792 = vpack.c.b16 %v770, %v768
    %v793 = vpack.c.b16 %v771, %v769
    %v794 = vpack.c.b16 %v774, %v772
    %v795 = vpack.c.b16 %v775, %v773
    %v796 = vpack.c.b16 %v778, %v776
    %v797 = vpack.c.b16 %v779, %v777
    %v798 = vpack.c.b16 %v782, %v780
    %v799 = vpack.c.b16 %v783, %v781
    %816 = vmatpush.bf16.msra.mxu0 %v798
    %817 = vmatpush.bf16.msra.mxu0 %v796
    %818 = vmatpush.bf16.msra.mxu0 %v794
    %819 = vmatpush.bf16.msra.mxu0 %v792
    %820 = vmatpush.bf16.msra.mxu0 %v790
    %821 = vmatpush.bf16.msra.mxu0 %v788
    %822 = vmatpush.bf16.msra.mxu0 %v786
    %823 = vmatpush.bf16.msra.mxu0 %v784
    %824 = vmatmul.bf16.gmra.mxu0 %v710
    %v825 = vpop.f32.mrf.mxu0
    %v826 = vadd.f32 %v732, %v825
    %v827 = vpop.f32.mrf.mxu0
    %v828 = vadd.f32 %v732, %v827
    %829 = vmatmul.bf16.gmra.mxu0 %v711
    %v830 = vpop.f32.mrf.mxu0
    %v831 = vadd.f32 %v732, %v830
    %v832 = vpop.f32.mrf.mxu0
    %v833 = vadd.f32 %v732, %v832
    %834 = vmatmul.bf16.gmra.mxu0 %v712
    %v835 = vpop.f32.mrf.mxu0
    %v836 = vadd.f32 %v732, %v835
    %v837 = vpop.f32.mrf.mxu0
    %v838 = vadd.f32 %v732, %v837
    %839 = vmatmul.bf16.gmra.mxu0 %v713
    %v840 = vpop.f32.mrf.mxu0
    %v841 = vadd.f32 %v732, %v840
    %v842 = vpop.f32.mrf.mxu0
    %v843 = vadd.f32 %v732, %v842
    %844 = vdwg.mxu0
    %845 = vmatpush.bf16.msra.mxu0 %v799
    %846 = vmatpush.bf16.msra.mxu0 %v797
    %847 = vmatpush.bf16.msra.mxu0 %v795
    %848 = vmatpush.bf16.msra.mxu0 %v793
    %849 = vmatpush.bf16.msra.mxu0 %v791
    %850 = vmatpush.bf16.msra.mxu0 %v789
    %851 = vmatpush.bf16.msra.mxu0 %v787
    %852 = vmatpush.bf16.msra.mxu0 %v785
    %853 = vmatmul.bf16.gmra.mxu0 %v710
    %v854 = vpop.f32.mrf.mxu0
    %v855 = vadd.f32 %v733, %v854
    %v856 = vpop.f32.mrf.mxu0
    %v857 = vadd.f32 %v733, %v856
    %858 = vmatmul.bf16.gmra.mxu0 %v711
    %v859 = vpop.f32.mrf.mxu0
    %v860 = vadd.f32 %v733, %v859
    %v861 = vpop.f32.mrf.mxu0
    %v862 = vadd.f32 %v733, %v861
    %863 = vmatmul.bf16.gmra.mxu0 %v712
    %v864 = vpop.f32.mrf.mxu0
    %v865 = vadd.f32 %v733, %v864
    %v866 = vpop.f32.mrf.mxu0
    %v867 = vadd.f32 %v733, %v866
    %868 = vmatmul.bf16.gmra.mxu0 %v713
    %v869 = vpop.f32.mrf.mxu0
    %v870 = vadd.f32 %v733, %v869
    %v871 = vpop.f32.mrf.mxu0
    %v872 = vadd.f32 %v733, %v871
    %873 = vdwg.mxu0
    %874 = vst [vmem:[#allocation2] sm:$0xff] %v826
    %875 = vst [vmem:[#allocation2 + $0x8] sm:$0xff] %v855
    %876 = vst [vmem:[#allocation2 + $0x10] sm:$0xff] %v828
    %877 = vst [vmem:[#allocation2 + $0x18] sm:$0xff] %v857
    %878 = vst [vmem:[#allocation2 + $0x20] sm:$0xff] %v831
    %879 = vst [vmem:[#allocation2 + $0x28] sm:$0xff] %v860
    %880 = vst [vmem:[#allocation2 + $0x30] sm:$0xff] %v833
    %881 = vst [vmem:[#allocation2 + $0x38] sm:$0xff] %v862
    %882 = vst [vmem:[#allocation2 + $0x40] sm:$0xff] %v836
    %883 = vst [vmem:[#allocation2 + $0x48] sm:$0xff] %v865
    %884 = vst [vmem:[#allocation2 + $0x50] sm:$0xff] %v838
    %885 = vst [vmem:[#allocation2 + $0x58] sm:$0xff] %v867
    %886 = vst [vmem:[#allocation2 + $0x60] sm:$0xff] %v841
    %887 = vst [vmem:[#allocation2 + $0x68] sm:$0xff] %v870
    %888 = vst [vmem:[#allocation2 + $0x70] sm:$0xff] %v843
    %889 = vst [vmem:[#allocation2 + $0x78] sm:$0xff] %v872
    %v890 = vld [vmem:[#allocation5] sm:$0xff]
    %v891 = vld [vmem:[#allocation5 + $0x8] sm:$0xff]
    %v892 = vld [vmem:[#allocation5 + $0x10] sm:$0xff]
    %v893 = vld [vmem:[#allocation5 + $0x18] sm:$0xff]
    %v894 = vld [vmem:[#allocation5 + $0x20] sm:$0xff]
    %v895 = vld [vmem:[#allocation5 + $0x28] sm:$0xff]
    %v896 = vld [vmem:[#allocation5 + $0x30] sm:$0xff]
    %v897 = vld [vmem:[#allocation5 + $0x38] sm:$0xff]
    %v898 = vld [vmem:[#allocation2] sm:$0xff]
    %v899 = vld [vmem:[#allocation2 + $0x8] sm:$0xff]
    %v900 = vmul.f32 %v898, %v56
    %v901 = vmul.f32 %v899, %v57
    %v902 = vtanh.pop %v900
    %v903 = vtanh.pop %v901
    %v904 = vmul.f32 %v902, %v56
    %v905 = vmul.f32 %v903, %v57
    %v906 = vadd.f32 %v904, %v58
    %v907 = vadd.f32 %v905, %v59
    %v908 = vmul.f32 %v906, 0.0
    %v909 = vmul.f32 %v906, %v907
    %911 = vrot.lane.b32.xlu0 %v909, 64
    %v912 = vpop.permute.xlu0 %911
    %v914 = vadd.f32 %v908, %v912
    %v915 = vtanh.pop %v914
    %v916 = vmul.f32 %v907, %v915
    %v917 = vld [vmem:[#allocation2 + $0x10] sm:$0xff]
    %v918 = vld [vmem:[#allocation2 + $0x18] sm:$0xff]
    %v919 = vpack.c.bf16 %v916, %v916
    %v928 = vunpack.c.l.b16 %v890
    %v929 = vunpack.c.h.b16 %v890
    %v930 = vunpack.c.l.b16 %v891
    %v931 = vunpack.c.h.b16 %v891
    %v932 = vunpack.c.l.b16 %v892
    %v933 = vunpack.c.h.b16 %v892
    %v934 = vunpack.c.l.b16 %v893
    %v935 = vunpack.c.h.b16 %v893
    %v936 = vunpack.c.l.b16 %v894
    %v937 = vunpack.c.h.b16 %v894
    %v938 = vunpack.c.l.b16 %v895
    %v939 = vunpack.c.h.b16 %v895
    %v940 = vunpack.c.l.b16 %v896
    %v941 = vunpack.c.h.b16 %v896
    %v942 = vunpack.c.l.b16 %v897
    %v943 = vunpack.c.h.b16 %v897
    %v944 = vpack.c.b16 %v930, %v928
    %v945 = vpack.c.b16 %v931, %v929
    %v946 = vpack.c.b16 %v934, %v932
    %v947 = vpack.c.b16 %v935, %v933
    %v948 = vpack.c.b16 %v938, %v936
    %v949 = vpack.c.b16 %v939, %v937
    %v950 = vpack.c.b16 %v942, %v940
    %v951 = vpack.c.b16 %v943, %v941
    %v961 = vsel %vm142, %v919, 0
    %963 = vmatpush.bf16.msra.mxu0 0
    %964 = vmatpush.bf16.msra.mxu0 0
    %965 = vmatpush.bf16.msra.mxu0 0
    %966 = vmatpush.bf16.msra.mxu0 0
    %967 = vmatpush.bf16.msra.mxu0 %v950
    %968 = vmatpush.bf16.msra.mxu0 %v948
    %969 = vmatpush.bf16.msra.mxu0 %v946
    %970 = vmatpush.bf16.msra.mxu0 %v944
    %971 = vmatmul.bf16.gmra.mxu0 %v961
    %v972 = vpop.f32.mrf.mxu0
    %v973 = vadd.f32 0.0, %v972
    %v974 = vpop.f32.mrf.mxu0
    %975 = vdwg.mxu0
    %976 = vmatpush.bf16.msra.mxu0 0
    %977 = vmatpush.bf16.msra.mxu0 0
    %978 = vmatpush.bf16.msra.mxu0 0
    %979 = vmatpush.bf16.msra.mxu0 0
    %980 = vmatpush.bf16.msra.mxu0 %v951
    %981 = vmatpush.bf16.msra.mxu0 %v949
    %982 = vmatpush.bf16.msra.mxu0 %v947
    %983 = vmatpush.bf16.msra.mxu0 %v945
    %984 = vmatmul.bf16.gmra.mxu0 %v961
    %v985 = vpop.f32.mrf.mxu0
    %v986 = vadd.f32 0.0, %v985
    %v987 = vpop.f32.mrf.mxu0
    %988 = vdwg.mxu0
    %v989 = vadd.f32 %v917, %v973
    %v990 = vadd.f32 %v918, %v986
    %v991 = vmul.f32 %v989, %v56
    %v992 = vmul.f32 %v990, %v57
    %v993 = vtanh.pop %v991
    %v994 = vtanh.pop %v992
    %v995 = vmul.f32 %v993, %v56
    %v996 = vmul.f32 %v994, %v57
    %v997 = vadd.f32 %v995, %v58
    %v998 = vadd.f32 %v996, %v59
    %v999 = vmul.f32 %v997, %v914
    %v1000 = vmul.f32 %v997, %v998
    %1002 = vrot.lane.b32.xlu0 %v1000, 64
    %v1003 = vpop.permute.xlu0 %1002
    %v1005 = vadd.f32 %v999, %v1003
    %v1006 = vtanh.pop %v1005
    %v1007 = vmul.f32 %v998, %v1006
    %v1008 = vld [vmem:[#allocation2 + $0x20] sm:$0xff]
    %v1009 = vld [vmem:[#allocation2 + $0x28] sm:$0xff]
    %v1010 = vpack.c.bf16 %v1007, %v1007
    %v1012 = vsel %vm142, %v1010, 0
    %1014 = vmatpush.bf16.msra.mxu0 0
    %1015 = vmatpush.bf16.msra.mxu0 0
    %1016 = vmatpush.bf16.msra.mxu0 0
    %1017 = vmatpush.bf16.msra.mxu0 0
    %1018 = vmatpush.bf16.msra.mxu0 %v950
    %1019 = vmatpush.bf16.msra.mxu0 %v948
    %1020 = vmatpush.bf16.msra.mxu0 %v946
    %1021 = vmatpush.bf16.msra.mxu0 %v944
    %1022 = vmatmul.bf16.gmra.mxu0 %v1012
    %v1023 = vpop.f32.mrf.mxu0
    %v1024 = vadd.f32 0.0, %v1023
    %v1025 = vpop.f32.mrf.mxu0
    %1026 = vdwg.mxu0
    %1027 = vmatpush.bf16.msra.mxu0 0
    %1028 = vmatpush.bf16.msra.mxu0 0
    %1029 = vmatpush.bf16.msra.mxu0 0
    %1030 = vmatpush.bf16.msra.mxu0 0
    %1031 = vmatpush.bf16.msra.mxu0 %v951
    %1032 = vmatpush.bf16.msra.mxu0 %v949
    %1033 = vmatpush.bf16.msra.mxu0 %v947
    %1034 = vmatpush.bf16.msra.mxu0 %v945
    %1035 = vmatmul.bf16.gmra.mxu0 %v1012
    %v1036 = vpop.f32.mrf.mxu0
    %v1037 = vadd.f32 0.0, %v1036
    %v1038 = vpop.f32.mrf.mxu0
    %1039 = vdwg.mxu0
    %v1040 = vadd.f32 %v1008, %v1024
    %v1041 = vadd.f32 %v1009, %v1037
    %v1042 = vmul.f32 %v1040, %v56
    %v1043 = vmul.f32 %v1041, %v57
    %v1044 = vtanh.pop %v1042
    %v1045 = vtanh.pop %v1043
    %v1046 = vmul.f32 %v1044, %v56
    %v1047 = vmul.f32 %v1045, %v57
    %v1048 = vadd.f32 %v1046, %v58
    %v1049 = vadd.f32 %v1047, %v59
    %v1050 = vmul.f32 %v1048, %v1005
    %v1051 = vmul.f32 %v1048, %v1049
    %1053 = vrot.lane.b32.xlu0 %v1051, 64
    %v1054 = vpop.permute.xlu0 %1053
    %v1056 = vadd.f32 %v1050, %v1054
    %v1057 = vtanh.pop %v1056
    %v1058 = vmul.f32 %v1049, %v1057
    %v1059 = vld [vmem:[#allocation2 + $0x30] sm:$0xff]
    %v1060 = vld [vmem:[#allocation2 + $0x38] sm:$0xff]
    %v1061 = vpack.c.bf16 %v1058, %v1058
    %v1063 = vsel %vm142, %v1061, 0
    %1065 = vmatpush.bf16.msra.mxu0 0
    %1066 = vmatpush.bf16.msra.mxu0 0
    %1067 = vmatpush.bf16.msra.mxu0 0
    %1068 = vmatpush.bf16.msra.mxu0 0
    %1069 = vmatpush.bf16.msra.mxu0 %v950
    %1070 = vmatpush.bf16.msra.mxu0 %v948
    %1071 = vmatpush.bf16.msra.mxu0 %v946
    %1072 = vmatpush.bf16.msra.mxu0 %v944
    %1073 = vmatmul.bf16.gmra.mxu0 %v1063
    %v1074 = vpop.f32.mrf.mxu0
    %v1075 = vadd.f32 0.0, %v1074
    %v1076 = vpop.f32.mrf.mxu0
    %1077 = vdwg.mxu0
    %1078 = vmatpush.bf16.msra.mxu0 0
    %1079 = vmatpush.bf16.msra.mxu0 0
    %1080 = vmatpush.bf16.msra.mxu0 0
    %1081 = vmatpush.bf16.msra.mxu0 0
    %1082 = vmatpush.bf16.msra.mxu0 %v951
    %1083 = vmatpush.bf16.msra.mxu0 %v949
    %1084 = vmatpush.bf16.msra.mxu0 %v947
    %1085 = vmatpush.bf16.msra.mxu0 %v945
    %1086 = vmatmul.bf16.gmra.mxu0 %v1063
    %v1087 = vpop.f32.mrf.mxu0
    %v1088 = vadd.f32 0.0, %v1087
    %v1089 = vpop.f32.mrf.mxu0
    %1090 = vdwg.mxu0
    %v1091 = vadd.f32 %v1059, %v1075
    %v1092 = vadd.f32 %v1060, %v1088
    %v1093 = vmul.f32 %v1091, %v56
    %v1094 = vmul.f32 %v1092, %v57
    %v1095 = vtanh.pop %v1093
    %v1096 = vtanh.pop %v1094
    %v1097 = vmul.f32 %v1095, %v56
    %v1098 = vmul.f32 %v1096, %v57
    %v1099 = vadd.f32 %v1097, %v58
    %v1100 = vadd.f32 %v1098, %v59
    %v1101 = vmul.f32 %v1099, %v1056
    %v1102 = vmul.f32 %v1099, %v1100
    %1104 = vrot.lane.b32.xlu0 %v1102, 64
    %v1105 = vpop.permute.xlu0 %1104
    %v1107 = vadd.f32 %v1101, %v1105
    %v1108 = vtanh.pop %v1107
    %v1109 = vmul.f32 %v1100, %v1108
    %v1110 = vld [vmem:[#allocation2 + $0x40] sm:$0xff]
    %v1111 = vld [vmem:[#allocation2 + $0x48] sm:$0xff]
    %v1112 = vpack.c.bf16 %v1109, %v1109
    %v1114 = vsel %vm142, %v1112, 0
    %1116 = vmatpush.bf16.msra.mxu0 0
    %1117 = vmatpush.bf16.msra.mxu0 0
    %1118 = vmatpush.bf16.msra.mxu0 0
    %1119 = vmatpush.bf16.msra.mxu0 0
    %1120 = vmatpush.bf16.msra.mxu0 %v950
    %1121 = vmatpush.bf16.msra.mxu0 %v948
    %1122 = vmatpush.bf16.msra.mxu0 %v946
    %1123 = vmatpush.bf16.msra.mxu0 %v944
    %1124 = vmatmul.bf16.gmra.mxu0 %v1114
    %v1125 = vpop.f32.mrf.mxu0
    %v1126 = vadd.f32 0.0, %v1125
    %v1127 = vpop.f32.mrf.mxu0
    %1128 = vdwg.mxu0
    %1129 = vmatpush.bf16.msra.mxu0 0
    %1130 = vmatpush.bf16.msra.mxu0 0
    %1131 = vmatpush.bf16.msra.mxu0 0
    %1132 = vmatpush.bf16.msra.mxu0 0
    %1133 = vmatpush.bf16.msra.mxu0 %v951
    %1134 = vmatpush.bf16.msra.mxu0 %v949
    %1135 = vmatpush.bf16.msra.mxu0 %v947
    %1136 = vmatpush.bf16.msra.mxu0 %v945
    %1137 = vmatmul.bf16.gmra.mxu0 %v1114
    %v1138 = vpop.f32.mrf.mxu0
    %v1139 = vadd.f32 0.0, %v1138
    %v1140 = vpop.f32.mrf.mxu0
    %1141 = vdwg.mxu0
    %v1142 = vadd.f32 %v1110, %v1126
    %v1143 = vadd.f32 %v1111, %v1139
    %v1144 = vmul.f32 %v1142, %v56
    %v1145 = vmul.f32 %v1143, %v57
    %v1146 = vtanh.pop %v1144
    %v1147 = vtanh.pop %v1145
    %v1148 = vmul.f32 %v1146, %v56
    %v1149 = vmul.f32 %v1147, %v57
    %v1150 = vadd.f32 %v1148, %v58
    %v1151 = vadd.f32 %v1149, %v59
    %v1152 = vmul.f32 %v1150, %v1107
    %v1153 = vmul.f32 %v1150, %v1151
    %1155 = vrot.lane.b32.xlu0 %v1153, 64
    %v1156 = vpop.permute.xlu0 %1155
    %v1158 = vadd.f32 %v1152, %v1156
    %v1159 = vtanh.pop %v1158
    %v1160 = vmul.f32 %v1151, %v1159
    %v1161 = vld [vmem:[#allocation2 + $0x50] sm:$0xff]
    %v1162 = vld [vmem:[#allocation2 + $0x58] sm:$0xff]
    %v1163 = vpack.c.bf16 %v1160, %v1160
    %v1165 = vsel %vm142, %v1163, 0
    %1167 = vmatpush.bf16.msra.mxu0 0
    %1168 = vmatpush.bf16.msra.mxu0 0
    %1169 = vmatpush.bf16.msra.mxu0 0
    %1170 = vmatpush.bf16.msra.mxu0 0
    %1171 = vmatpush.bf16.msra.mxu0 %v950
    %1172 = vmatpush.bf16.msra.mxu0 %v948
    %1173 = vmatpush.bf16.msra.mxu0 %v946
    %1174 = vmatpush.bf16.msra.mxu0 %v944
    %1175 = vmatmul.bf16.gmra.mxu0 %v1165
    %v1176 = vpop.f32.mrf.mxu0
    %v1177 = vadd.f32 0.0, %v1176
    %v1178 = vpop.f32.mrf.mxu0
    %1179 = vdwg.mxu0
    %1180 = vmatpush.bf16.msra.mxu0 0
    %1181 = vmatpush.bf16.msra.mxu0 0
    %1182 = vmatpush.bf16.msra.mxu0 0
    %1183 = vmatpush.bf16.msra.mxu0 0
    %1184 = vmatpush.bf16.msra.mxu0 %v951
    %1185 = vmatpush.bf16.msra.mxu0 %v949
    %1186 = vmatpush.bf16.msra.mxu0 %v947
    %1187 = vmatpush.bf16.msra.mxu0 %v945
    %1188 = vmatmul.bf16.gmra.mxu0 %v1165
    %v1189 = vpop.f32.mrf.mxu0
    %v1190 = vadd.f32 0.0, %v1189
    %v1191 = vpop.f32.mrf.mxu0
    %1192 = vdwg.mxu0
    %v1193 = vadd.f32 %v1161, %v1177
    %v1194 = vadd.f32 %v1162, %v1190
    %v1195 = vmul.f32 %v1193, %v56
    %v1196 = vmul.f32 %v1194, %v57
    %v1197 = vtanh.pop %v1195
    %v1198 = vtanh.pop %v1196
    %v1199 = vmul.f32 %v1197, %v56
    %v1200 = vmul.f32 %v1198, %v57
    %v1201 = vadd.f32 %v1199, %v58
    %v1202 = vadd.f32 %v1200, %v59
    %v1203 = vmul.f32 %v1201, %v1158
    %v1204 = vmul.f32 %v1201, %v1202
    %1206 = vrot.lane.b32.xlu0 %v1204, 64
    %v1207 = vpop.permute.xlu0 %1206
    %v1209 = vadd.f32 %v1203, %v1207
    %v1210 = vtanh.pop %v1209
    %v1211 = vmul.f32 %v1202, %v1210
    %v1212 = vld [vmem:[#allocation2 + $0x60] sm:$0xff]
    %v1213 = vld [vmem:[#allocation2 + $0x68] sm:$0xff]
    %v1214 = vpack.c.bf16 %v1211, %v1211
    %v1216 = vsel %vm142, %v1214, 0
    %1218 = vmatpush.bf16.msra.mxu0 0
    %1219 = vmatpush.bf16.msra.mxu0 0
    %1220 = vmatpush.bf16.msra.mxu0 0
    %1221 = vmatpush.bf16.msra.mxu0 0
    %1222 = vmatpush.bf16.msra.mxu0 %v950
    %1223 = vmatpush.bf16.msra.mxu0 %v948
    %1224 = vmatpush.bf16.msra.mxu0 %v946
    %1225 = vmatpush.bf16.msra.mxu0 %v944
    %1226 = vmatmul.bf16.gmra.mxu0 %v1216
    %v1227 = vpop.f32.mrf.mxu0
    %v1228 = vadd.f32 0.0, %v1227
    %v1229 = vpop.f32.mrf.mxu0
    %1230 = vdwg.mxu0
    %1231 = vmatpush.bf16.msra.mxu0 0
    %1232 = vmatpush.bf16.msra.mxu0 0
    %1233 = vmatpush.bf16.msra.mxu0 0
    %1234 = vmatpush.bf16.msra.mxu0 0
    %1235 = vmatpush.bf16.msra.mxu0 %v951
    %1236 = vmatpush.bf16.msra.mxu0 %v949
    %1237 = vmatpush.bf16.msra.mxu0 %v947
    %1238 = vmatpush.bf16.msra.mxu0 %v945
    %1239 = vmatmul.bf16.gmra.mxu0 %v1216
    %v1240 = vpop.f32.mrf.mxu0
    %v1241 = vadd.f32 0.0, %v1240
    %v1242 = vpop.f32.mrf.mxu0
    %1243 = vdwg.mxu0
    %v1244 = vadd.f32 %v1212, %v1228
    %v1245 = vadd.f32 %v1213, %v1241
    %v1246 = vmul.f32 %v1244, %v56
    %v1247 = vmul.f32 %v1245, %v57
    %v1248 = vtanh.pop %v1246
    %v1249 = vtanh.pop %v1247
    %v1250 = vmul.f32 %v1248, %v56
    %v1251 = vmul.f32 %v1249, %v57
    %v1252 = vadd.f32 %v1250, %v58
    %v1253 = vadd.f32 %v1251, %v59
    %v1254 = vmul.f32 %v1252, %v1209
    %v1255 = vmul.f32 %v1252, %v1253
    %1257 = vrot.lane.b32.xlu0 %v1255, 64
    %v1258 = vpop.permute.xlu0 %1257
    %v1260 = vadd.f32 %v1254, %v1258
    %v1261 = vtanh.pop %v1260
    %v1262 = vmul.f32 %v1253, %v1261
    %v1263 = vld [vmem:[#allocation2 + $0x70] sm:$0xff]
    %v1264 = vld [vmem:[#allocation2 + $0x78] sm:$0xff]
    %v1265 = vpack.c.bf16 %v1262, %v1262
    %v1267 = vsel %vm142, %v1265, 0
    %1269 = vmatpush.bf16.msra.mxu0 0
    %1270 = vmatpush.bf16.msra.mxu0 0
    %1271 = vmatpush.bf16.msra.mxu0 0
    %1272 = vmatpush.bf16.msra.mxu0 0
    %1273 = vmatpush.bf16.msra.mxu0 %v950
    %1274 = vmatpush.bf16.msra.mxu0 %v948
    %1275 = vmatpush.bf16.msra.mxu0 %v946
    %1276 = vmatpush.bf16.msra.mxu0 %v944
    %1277 = vmatmul.bf16.gmra.mxu0 %v1267
    %v1278 = vpop.f32.mrf.mxu0
    %v1279 = vadd.f32 0.0, %v1278
    %v1280 = vpop.f32.mrf.mxu0
    %1281 = vdwg.mxu0
    %1282 = vmatpush.bf16.msra.mxu0 0
    %1283 = vmatpush.bf16.msra.mxu0 0
    %1284 = vmatpush.bf16.msra.mxu0 0
    %1285 = vmatpush.bf16.msra.mxu0 0
    %1286 = vmatpush.bf16.msra.mxu0 %v951
    %1287 = vmatpush.bf16.msra.mxu0 %v949
    %1288 = vmatpush.bf16.msra.mxu0 %v947
    %1289 = vmatpush.bf16.msra.mxu0 %v945
    %1290 = vmatmul.bf16.gmra.mxu0 %v1267
    %v1291 = vpop.f32.mrf.mxu0
    %v1292 = vadd.f32 0.0, %v1291
    %v1293 = vpop.f32.mrf.mxu0
    %1294 = vdwg.mxu0
    %v1295 = vadd.f32 %v1263, %v1279
    %v1296 = vadd.f32 %v1264, %v1292
    %v1297 = vmul.f32 %v1295, %v56
    %v1298 = vmul.f32 %v1296, %v57
    %v1299 = vtanh.pop %v1297
    %v1300 = vtanh.pop %v1298
    %v1301 = vmul.f32 %v1299, %v56
    %v1302 = vmul.f32 %v1300, %v57
    %v1303 = vadd.f32 %v1301, %v58
    %v1304 = vadd.f32 %v1302, %v59
    %v1305 = vmul.f32 %v1303, %v1260
    %v1306 = vmul.f32 %v1303, %v1304
    %1308 = vrot.lane.b32.xlu0 %v1306, 64
    %v1309 = vpop.permute.xlu0 %1308
    %v1311 = vadd.f32 %v1305, %v1309
    %v1312 = vtanh.pop %v1311
    %v1313 = vmul.f32 %v1304, %v1312
    %vm1314 = vcmp.lt.s32.totalorder %v52, 32
    %v1315 = vsel %vm1314, %v916, %v1313
    %v1316 = vsel %vm1314, %v1007, %v1262
    %v1317 = vsel %vm1314, %v1058, %v1211
    %v1318 = vsel %vm1314, %v1109, %v1160
    %v1319 = vsel %vm1314, %v1160, %v1109
    %v1320 = vsel %vm1314, %v1211, %v1058
    %v1321 = vsel %vm1314, %v1262, %v1007
    %v1322 = vsel %vm1314, %v1313, %v916
    %v1323 = vld [vmem:[%s7] sm:$0x1]
    %s1324 = sld [smem:[#allocation4]]
    %v1326 = vperm.slane %v1323, 0
    %v1328 = vmul.f32 %v1315, %v1326
    %v1329 = vmul.f32 %v1316, %v1326
    %v1330 = vmul.f32 %v1317, %v1326
    %v1331 = vmul.f32 %v1318, %v1326
    %v1332 = vmul.f32 %v1319, %v1326
    %v1333 = vmul.f32 %v1320, %v1326
    %v1334 = vmul.f32 %v1321, %v1326
    %v1335 = vmul.f32 %v1322, %v1326
    %v1336 = vsel %vm142, %v1328, 0.0
    %1337 = vadd.xlane.f32.xlu0 %v1336
    %v1338 = vpop.xlane.xlu0 %1337
    %v1339 = vsel %vm142, %v1329, 0.0
    %1340 = vadd.xlane.f32.xlu0 %v1339
    %v1341 = vpop.xlane.xlu0 %1340
    %v1342 = vsel %vm142, %v1330, 0.0
    %1343 = vadd.xlane.f32.xlu0 %v1342
    %v1344 = vpop.xlane.xlu0 %1343
    %v1345 = vsel %vm142, %v1331, 0.0
    %1346 = vadd.xlane.f32.xlu0 %v1345
    %v1347 = vpop.xlane.xlu0 %1346
    %v1348 = vsel %vm142, %v1332, 0.0
    %1349 = vadd.xlane.f32.xlu0 %v1348
    %v1350 = vpop.xlane.xlu0 %1349
    %v1351 = vsel %vm142, %v1333, 0.0
    %1352 = vadd.xlane.f32.xlu0 %v1351
    %v1353 = vpop.xlane.xlu0 %1352
    %v1354 = vsel %vm142, %v1334, 0.0
    %1355 = vadd.xlane.f32.xlu0 %v1354
    %v1356 = vpop.xlane.xlu0 %1355
    %v1357 = vsel %vm142, %v1335, 0.0
    %1358 = vadd.xlane.f32.xlu0 %v1357
    %v1359 = vpop.xlane.xlu0 %1358
    %v1360 = vstv %s1324
    %v1361 = vadd.f32 %v1338, %v1360
    %v1362 = vadd.f32 %v1341, %v1360
    %v1363 = vadd.f32 %v1344, %v1360
    %v1364 = vadd.f32 %v1347, %v1360
    %v1365 = vadd.f32 %v1350, %v1360
    %v1366 = vadd.f32 %v1353, %v1360
    %v1367 = vadd.f32 %v1356, %v1360
    %v1368 = vadd.f32 %v1359, %v1360
    %v1369 = vmax.f32 %v1361, %v1365
    %v1370 = vmax.f32 %v1362, %v1366
    %v1371 = vmax.f32 %v1363, %v1367
    %v1372 = vmax.f32 %v1364, %v1368
    %v1373 = vmax.f32 %v1369, %v1370
    %v1374 = vmax.f32 %v1371, %v1372
    %v1375 = vmax.f32 %v1373, %v1374
    %v1376 = vsub.f32 %v1361, %v1375
    %v1377 = vsub.f32 %v1362, %v1375
    %v1378 = vsub.f32 %v1363, %v1375
    %v1379 = vsub.f32 %v1364, %v1375
    %v1380 = vsub.f32 %v1365, %v1375
    %v1381 = vsub.f32 %v1366, %v1375
    %v1382 = vsub.f32 %v1367, %v1375
    %v1383 = vsub.f32 %v1368, %v1375
    %v1384 = vmul.f32 %v1376, 1.442695
    %v1385 = vpow.pop %v1384
    %v1386 = vmul.f32 %v1377, 1.442695
    %v1387 = vpow.pop %v1386
    %v1388 = vmul.f32 %v1378, 1.442695
    %v1389 = vpow.pop %v1388
    %v1390 = vmul.f32 %v1379, 1.442695
    %v1391 = vpow.pop %v1390
    %v1392 = vmul.f32 %v1380, 1.442695
    %v1393 = vpow.pop %v1392
    %v1394 = vmul.f32 %v1381, 1.442695
    %v1395 = vpow.pop %v1394
    %v1396 = vmul.f32 %v1382, 1.442695
    %v1397 = vpow.pop %v1396
    %v1398 = vmul.f32 %v1383, 1.442695
    %v1399 = vpow.pop %v1398
    %v1400 = vadd.f32 %v1385, %v1387
    %v1401 = vadd.f32 %v1400, %v1389
    %v1402 = vadd.f32 %v1401, %v1391
    %v1403 = vadd.f32 %v1402, %v1393
    %v1404 = vadd.f32 %v1403, %v1395
    %v1405 = vadd.f32 %v1404, %v1397
    %v1406 = vadd.f32 %v1405, %v1399
    %v1407 = vrcp.pop %v1406
    %v1408 = vmul.f32 %v1385, %v1407
    %v1409 = vmul.f32 %v1387, %v1407
    %v1410 = vmul.f32 %v1389, %v1407
    %v1411 = vmul.f32 %v1391, %v1407
    %v1412 = vmul.f32 %v1393, %v1407
    %v1413 = vmul.f32 %v1395, %v1407
    %v1414 = vmul.f32 %v1397, %v1407
    %v1415 = vmul.f32 %v1399, %v1407
    %v1416 = vmul.f32 %v1315, %v1408
    %v1417 = vmul.f32 %v1316, %v1409
    %v1418 = vmul.f32 %v1317, %v1410
    %v1419 = vmul.f32 %v1318, %v1411
    %v1420 = vmul.f32 %v1319, %v1412
    %v1421 = vmul.f32 %v1320, %v1413
    %v1422 = vmul.f32 %v1321, %v1414
    %v1423 = vmul.f32 %v1322, %v1415
    %v1424 = vsel %vm142, %v1416, 0.0
    %v1425 = vsel %vm142, %v1417, 0.0
    %v1426 = vadd.f32 %v1424, %v1425
    %v1427 = vsel %vm142, %v1418, 0.0
    %v1428 = vadd.f32 %v1426, %v1427
    %v1429 = vsel %vm142, %v1419, 0.0
    %v1430 = vadd.f32 %v1428, %v1429
    %v1431 = vsel %vm142, %v1420, 0.0
    %v1432 = vadd.f32 %v1430, %v1431
    %v1433 = vsel %vm142, %v1421, 0.0
    %v1434 = vadd.f32 %v1432, %v1433
    %v1435 = vsel %vm142, %v1422, 0.0
    %v1436 = vadd.f32 %v1434, %v1435
    %v1437 = vsel %vm142, %v1423, 0.0
    %v1438 = vadd.f32 %v1436, %v1437
    %1439 = vst.msk [vmem:[#allocation8] sm:$0xff] %vm142, %v1322
    %1441 = vrot.lane.b32.xlu0 %v1438, 64
    %v1442 = vpop.permute.xlu0 %1441
    %1444 = vst.msk [vmem:[#allocation8] sm:$0xff] %vm658, %v1442
    // Predicated region
    $region42: #{history_attention_rnn_pallas.1} parent=1 // pred_check
      _
    $region43: #{history_attention_rnn_pallas.1} parent=1 // pred_check_branch
      %1446 = sbr.rel (0) target = $region45
    $region44: #{history_attention_rnn_pallas.1} parent=1 // pred_region
      %1448 = vsyncadd [#allocation7], 0
      %s1450 = sshll.u32 [#allocation8], 4
      %s1451 = int_to_ptr.vmem [resolvable:$true] %s1450
      %s1452 = sshll.u32 %s9, 4
      %s1453 = int_to_ptr.hbm [resolvable:$true] %s1452
      %1455 = dma.vmem_to_hbm [thread:$0]  %s1451, 128, %s1453, [#allocation7]
    $region45: #{history_attention_rnn_pallas.1} parent=1 // pred_fallthru
      _
    // Predicated region
    $region46: #{history_attention_rnn_pallas.1} parent=1 // pred_check
      _
    $region47: #{history_attention_rnn_pallas.1} parent=1 // pred_check_branch
      %1457 = sbr.rel (0) target = $region49
    $region48: #{history_attention_rnn_pallas.1} parent=1 // pred_region
      %1459 = dma.done [#allocation7], 128
    $region49: #{history_attention_rnn_pallas.1} parent=1 // pred_fallthru
      _
    %1460 = vsyncpa [#allocation6], 1
    %1461 = vsyncpa [#allocation7], 1

</llo_original>
